<compile_context>
chip_gen: v5e
topology: v5e:2x2
jax: 0.10.0
libtpu: 0.0.40
codegen_flags: <defaults>
</compile_context>

<pallas_src>
import functools

import numpy as np
import jax
import jax.numpy as jnp
from jax.experimental import pallas as pl
from jax.experimental.pallas import tpu as pltpu

H = 128            # hidden size of the (simulated) BERT encoders (lane axis)
S = 16             # coherence-pair padded sequence length
GMAX = 8           # static upper bound on sentences per topic group (sublane axis)
TB_MAX = 256       # max batch rows per grid step (v6e/v5e can go 512-1024 w/ more VMEM)
OUT_LANES = 128    # lane-dense partial-sum block (lanes)
OUT_SUB = 8        # sublane-aligned partial-sum block (sublanes)
MARGIN = 1.0
META_COLS = 8      # [l1, l2, ctx_cnt, pos_cnt, neg_cnt, valid, pad, pad]


# --------------------------- fused SegModel kernel ---------------------------
def _fused_seg_kernel(meta_ref, hidp_ref, hidn_ref, grp_ref, wp_ref, out_ref, *, tb):
    f32 = jnp.float32
    meta = meta_ref[...]                                   # (tb, 8, 1) int32

    # ---- coherence head: one fused, lane-invariant per-(row,seq) weight ----
    l1 = meta[:, 0:1, :]                                   # (tb, 1, 1)
    l2 = meta[:, 1:2, :]
    l1c = jnp.minimum(jnp.minimum(l1, 124), S)             # clamp to S as well so the
    tot = jnp.minimum(l1 + l2, S)                          # denominators match the mask
    inv1 = 1.0 / jnp.maximum(l1c, 1).astype(f32)           # div-by-zero guards
    inv2 = 1.0 / jnp.maximum(tot - l1c, 1).astype(f32)

    seq = jax.lax.broadcasted_iota(jnp.int32, (tb, S, 1), 1)   # lane-invariant iota
    m1 = (seq < l1c).astype(f32)                               # (tb, S, 1)
    m2 = jnp.logical_and(seq >= l1c, seq < tot).astype(f32)
    w_seq = 0.5 * (inv1 * m1 + inv2 * m2)                      # (tb, S, 1)

    wp = wp_ref[...]                                       # (2, H) f32
    w0 = wp[0:1, :]                                        # W[0, :]  (logit column 0)
    b0 = wp[1:2, 0:1]                                      # bias[0]  (1, 1)

    def coheren_score(hid_ref):                            # -> (tb, 1, 1)
        hid = hid_ref[...].astype(f32)                     # bf16 -> f32 in VMEM
        hs = jnp.sum(hid * w_seq, axis=1, keepdims=True)   # (tb, 1, H) == (hs1+hs2)/2
        # NSP head column 0 only: VPU dot, no padded MXU matmul.
        return jnp.sum(hs * w0, axis=2, keepdims=True) + b0

    cpos = coheren_score(hidp_ref)
    cneg = coheren_score(hidn_ref)

    # ---- topic group means (dense [3, tb, GMAX, H] layout) ----
    rid = jax.lax.broadcasted_iota(jnp.int32, (tb, GMAX, 1), 1)

    def group_mean(g):
        rows = grp_ref[g].astype(f32)                      # (tb, GMAX, H)
        cnt = meta[:, 2 + g:3 + g, :]                      # (tb, 1, 1) int32
        mask = (rid < cnt).astype(f32)                     # (tb, GMAX, 1) lane-invariant
        inv = 1.0 / jnp.maximum(cnt, 1).astype(f32)
        return jnp.sum(rows * mask, axis=1, keepdims=True) * inv   # (tb, 1, H)

    ctx_m = group_mean(0)
    pos_m = group_mean(1)
    neg_m = group_mean(2)

    # ---- cosine similarity (per-norm eps=1e-8, fused via rsqrt) ----
    eps_sq = jnp.float32(1e-16)   # max(norm, eps) == sqrt(max(norm^2, eps^2))

    def inv_norm(v):                                       # (tb, 1, H) -> (tb, 1, 1)
        return jax.lax.rsqrt(jnp.maximum(jnp.sum(v * v, axis=2, keepdims=True), eps_sq))

    ia_ctx = inv_norm(ctx_m)                               # hoisted, reused twice

    def cosine_with_ctx(v):
        return jnp.sum(ctx_m * v, axis=2, keepdims=True) * ia_ctx * inv_norm(v)

    pos_score = cpos + cosine_with_ctx(pos_m)
    neg_score = cneg + cosine_with_ctx(neg_m)

    valid = (meta[:, 5:6, :] > 0).astype(f32)              # padded batch rows -> 0
    hinge = jnp.maximum(MARGIN - (pos_score - neg_score), 0.0) * valid

    # Per-tile partial sum; grid axis is "parallel" (megacore-friendly on v7x).
    out_ref[...] = jnp.broadcast_to(jnp.sum(hinge), (1, OUT_SUB, OUT_LANES))


def seg_model_forward(meta, hid_pos, hid_neg, groups, wparams, *, batch_size):
    b_pad = meta.shape[0]
    tb = min(TB_MAX, b_pad)
    assert b_pad % tb == 0
    num_tiles = b_pad // tb
    kernel = functools.partial(_fused_seg_kernel, tb=tb)
    partials = pl.pallas_call(
        kernel,
        out_shape=jax.ShapeDtypeStruct((num_tiles, OUT_SUB, OUT_LANES), jnp.float32),
        grid_spec=pltpu.PrefetchScalarGridSpec(
            num_scalar_prefetch=0,
            grid=(num_tiles,),
            in_specs=[
                pl.BlockSpec((tb, META_COLS, 1), lambda i: (i, 0, 0)),
                pl.BlockSpec((tb, S, H), lambda i: (i, 0, 0)),
                pl.BlockSpec((tb, S, H), lambda i: (i, 0, 0)),
                pl.BlockSpec((3, tb, GMAX, H), lambda i: (0, i, 0, 0)),
                pl.BlockSpec((2, H), lambda i: (0, 0)),
            ],
            out_specs=pl.BlockSpec((1, OUT_SUB, OUT_LANES), lambda i: (i, 0, 0)),
        ),
        compiler_params=pltpu.CompilerParams(
            # Independent per-tile partial sums -> parallel axis (2 TCs on v7x).
            dimension_semantics=("parallel",),
            # TB=256 bf16 inputs need ~10 MiB double-buffered; 48 MiB leaves
            # headroom everywhere incl. v7x's 64 MiB/TC.  On v6e/v5e this can be
            # raised (96 MiB) together with TB_MAX=512-1024 for more HBM roofline.
            vmem_limit_bytes=48 * 1024 * 1024,
        ),
    )(meta, hid_pos, hid_neg, groups, wparams)
    margin_loss = jnp.sum(partials[:, 0, 0]) / jnp.float32(batch_size)
    # TODO(synk): topic_train()/tet() (argsort/bisect/early-break scans) have no
    # clean Pallas equivalent; topic_loss stays 0.
    topic_loss = jnp.float32(0.0)
    loss = margin_loss + topic_loss
    return loss, margin_loss, topic_loss


# ------------------------ host-side dense input packing ----------------------
def _padded_batch(b):
    b_pad = ((b + 7) // 8) * 8
    if b_pad > TB_MAX:
        b_pad = ((b_pad + TB_MAX - 1) // TB_MAX) * TB_MAX
    return b_pad


def pack_seg_inputs(hid_pos, hid_neg, l1, l2, topic_ctx, topic_pos, topic_neg,
                    ctx_num, pos_num, neg_num, W, bias):
    B = hid_pos.shape[0]
    b_pad = _padded_batch(B)
    assert max(list(ctx_num) + list(pos_num) + list(neg_num)) <= GMAX

    hp = np.zeros((b_pad, S, H), np.float32); hp[:B] = np.asarray(hid_pos)
    hn = np.zeros((b_pad, S, H), np.float32); hn[:B] = np.asarray(hid_neg)

    meta = np.zeros((b_pad, META_COLS, 1), np.int32)
    meta[:, :5, 0] = 1                       # harmless defaults for padded rows
    for b in range(B):
        meta[b, 0, 0] = int(l1[b])
        meta[b, 1, 0] = int(l2[b])
        meta[b, 2, 0] = int(ctx_num[b])
        meta[b, 3, 0] = int(pos_num[b])
        meta[b, 4, 0] = int(neg_num[b])
        meta[b, 5, 0] = 1                    # valid

    groups = np.zeros((3, b_pad, GMAX, H), np.float32)
    for g, (rows, nums) in enumerate(((topic_ctx, ctx_num),
                                      (topic_pos, pos_num),
                                      (topic_neg, neg_num))):
        rows = np.asarray(rows)
        off = 0
        for b, n in enumerate(nums):
            n = int(n)
            groups[g, b, :n] = rows[off:off + n]
            off += n

    wparams = np.zeros((2, H), np.float32)
    wparams[0] = np.asarray(W)[0]            # weight row of NSP logit column 0
    wparams[1, 0] = float(np.asarray(bias)[0])

    # Bulk tensors travel as bfloat16 (HBM-bandwidth-bound kernel); meta/wparams
    # stay int32/f32.
    return (jnp.asarray(meta),
            jnp.asarray(hp).astype(jnp.bfloat16),
            jnp.asarray(hn).astype(jnp.bfloat16),
            jnp.asarray(groups).astype(jnp.bfloat16),
            jnp.asarray(wparams))


# ---------------------------- pure-JAX reference -----------------------------
def reference_forward(hid_pos, hid_neg, l1, l2, topic_ctx, topic_pos, topic_neg,
                      ctx_num, pos_num, neg_num, W, bias):
    B = hid_pos.shape[0]

    def coheren_scores(hid):
        outs = []
        for i in range(B):
            a = min(124, int(l1[i]))
            hs1 = hid[i, :a].mean(axis=0)
            hs2 = hid[i, a:int(l1[i]) + int(l2[i])].mean(axis=0)
            hs = (hs1 + hs2) / 2.0
            outs.append(hs @ W.T + bias)
        return jnp.stack(outs)

    def group_means(x, nums):
        means, c = [], 0
        for v in nums:
            means.append(x[c:c + int(v)].mean(axis=0))
            c += int(v)
        return jnp.stack(means)

    def cos(a, b):
        dot = jnp.sum(a * b, axis=1)
        na = jnp.maximum(jnp.linalg.norm(a, axis=1), 1e-8)
        nb = jnp.maximum(jnp.linalg.norm(b, axis=1), 1e-8)
        return dot / (na * nb)

    cpos = coheren_scores(hid_pos)[:, 0]
    cneg = coheren_scores(hid_neg)[:, 0]
    cm = group_means(topic_ctx, ctx_num)
    pm = group_means(topic_pos, pos_num)
    nm = group_means(topic_neg, neg_num)
    pos_scores = cpos + cos(cm, pm)
    neg_scores = cneg + cos(cm, nm)
    return jnp.mean(jnp.maximum(MARGIN - (pos_scores - neg_scores), 0.0))


def _bf16_round(x):
    # The kernel reads bf16 inputs; feed the same rounded values to the f32
    # reference so the tolerance check compares identical math inputs.
    return x.astype(jnp.bfloat16).astype(jnp.float32)


if __name__ == "__main__":
    B = 2
    key = jax.random.PRNGKey(0)
    k = jax.random.split(key, 8)

    # synthesized encoder outputs (stand-ins for the pretrained BERT models)
    coheren_hid_pos = _bf16_round(jax.random.normal(k[0], (B, S, H), jnp.float32))
    coheren_hid_neg = _bf16_round(jax.random.normal(k[1], (B, S, H), jnp.float32))
    l1 = [10, 7]
    l2 = [5, 6]

    ctx_num, pos_num, neg_num = [3, 2], [2, 3], [2, 2]
    topic_ctx = _bf16_round(jax.random.normal(k[2], (sum(ctx_num), H), jnp.float32))
    topic_pos = _bf16_round(jax.random.normal(k[3], (sum(pos_num), H), jnp.float32))
    topic_neg = _bf16_round(jax.random.normal(k[4], (sum(neg_num), H), jnp.float32))

    # deterministic NSP head parameters: nn.Linear(H, 2) -> W [2, H], bias [2]
    W = 0.02 * jax.random.normal(k[5], (2, H), jnp.float32)
    bias = 0.02 * jax.random.normal(k[6], (2,), jnp.float32)

    meta, hidp, hidn, groups, wparams = pack_seg_inputs(
        coheren_hid_pos, coheren_hid_neg, l1, l2,
        topic_ctx, topic_pos, topic_neg, ctx_num, pos_num, neg_num, W, bias)

    fwd = jax.jit(seg_model_forward, static_argnames=("batch_size",))
    loss, margin_loss, topic_loss = fwd(meta, hidp, hidn, groups, wparams,
                                        batch_size=B)
    jax.block_until_ready((loss, margin_loss, topic_loss))

    ref_margin = reference_forward(coheren_hid_pos, coheren_hid_neg, l1, l2,
                                   topic_ctx, topic_pos, topic_neg,
                                   ctx_num, pos_num, neg_num, W, bias)
    assert jnp.allclose(margin_loss, ref_margin, atol=2e-4, rtol=2e-4), \
        (margin_loss, ref_margin)

    print("KERNEL_OK")
</pallas_src>

<mosaic_0001>
module attributes {stable_mosaic.version = 11 : i64} {
  func.func @_fused_seg_kernel(%arg0: i32, %arg1: memref<8x8x1xi32, #tpu.memory_space<vmem>>, %arg2: memref<8x16x128xbf16, #tpu.memory_space<vmem>>, %arg3: memref<8x16x128xbf16, #tpu.memory_space<vmem>>, %arg4: memref<3x8x8x128xbf16, #tpu.memory_space<vmem>>, %arg5: memref<2x128xf32, #tpu.memory_space<vmem>>, %arg6: memref<1x8x128xf32, #tpu.memory_space<vmem>>) attributes {dimension_semantics = [#tpu.dimension_semantics<parallel>], iteration_bounds = array<i64: 1>, scalar_prefetch = 0 : i64, scratch_operands = 0 : i64, tpu.core_type = #tpu.core_type<tc>, window_params = [{transform_indices = @transform_0, window_bounds = array<i64: 8, 8, 1>}, {transform_indices = @transform_1, window_bounds = array<i64: 8, 16, 128>}, {transform_indices = @transform_2, window_bounds = array<i64: 8, 16, 128>}, {transform_indices = @transform_3, window_bounds = array<i64: 3, 8, 8, 128>}, {pipeline_mode = #tpu.pipeline_mode<synchronous>, transform_indices = @transform_4, window_bounds = array<i64: 2, 128>}, {transform_indices = @transform_5, window_bounds = array<i64: 1, 8, 128>}]} {
    %c0 = arith.constant 0 : index
    %c0_0 = arith.constant 0 : index
    %c0_1 = arith.constant 0 : index
    %0 = vector.load %arg1[%c0, %c0_0, %c0_1] : memref<8x8x1xi32, #tpu.memory_space<vmem>>, vector<8x8x1xi32>
    %1 = vector.extract_strided_slice %0 {offsets = [0, 0, 0], sizes = [8, 1, 1], strides = [1, 1, 1]} : vector<8x8x1xi32> to vector<8x1x1xi32>
    %2 = vector.extract_strided_slice %0 {offsets = [0, 1, 0], sizes = [8, 1, 1], strides = [1, 1, 1]} : vector<8x8x1xi32> to vector<8x1x1xi32>
    %c124_i32 = arith.constant 124 : i32
    %3 = vector.broadcast %c124_i32 : i32 to vector<8x1x1xi32>
    %4 = arith.minsi %1, %3 : vector<8x1x1xi32>
    %c16_i32 = arith.constant 16 : i32
    %5 = vector.broadcast %c16_i32 : i32 to vector<8x1x1xi32>
    %6 = arith.minsi %4, %5 : vector<8x1x1xi32>
    %7 = arith.addi %1, %2 : vector<8x1x1xi32>
    %c16_i32_2 = arith.constant 16 : i32
    %8 = vector.broadcast %c16_i32_2 : i32 to vector<8x1x1xi32>
    %9 = arith.minsi %7, %8 : vector<8x1x1xi32>
    %c1_i32 = arith.constant 1 : i32
    %10 = vector.broadcast %c1_i32 : i32 to vector<8x1x1xi32>
    %11 = arith.maxsi %6, %10 : vector<8x1x1xi32>
    %12 = arith.sitofp %11 : vector<8x1x1xi32> to vector<8x1x1xf32>
    %cst = arith.constant 1.000000e+00 : f32
    %13 = vector.broadcast %cst : f32 to vector<8x1x1xf32>
    %14 = arith.divf %13, %12 : vector<8x1x1xf32>
    %15 = arith.subi %9, %6 : vector<8x1x1xi32>
    %c1_i32_3 = arith.constant 1 : i32
    %16 = vector.broadcast %c1_i32_3 : i32 to vector<8x1x1xi32>
    %17 = arith.maxsi %15, %16 : vector<8x1x1xi32>
    %18 = arith.sitofp %17 : vector<8x1x1xi32> to vector<8x1x1xf32>
    %cst_4 = arith.constant 1.000000e+00 : f32
    %19 = vector.broadcast %cst_4 : f32 to vector<8x1x1xf32>
    %20 = arith.divf %19, %18 : vector<8x1x1xf32>
    %21 = tpu.iota {dimensions = array<i32: 1>} : vector<8x16x1xi32>
    %22 = vector.broadcast %6 : vector<8x1x1xi32> to vector<8x16x1xi32>
    %23 = arith.cmpi slt, %21, %22 : vector<8x16x1xi32>
    %24 = arith.extui %23 : vector<8x16x1xi1> to vector<8x16x1xi32>
    %25 = arith.sitofp %24 : vector<8x16x1xi32> to vector<8x16x1xf32>
    %26 = vector.broadcast %6 : vector<8x1x1xi32> to vector<8x16x1xi32>
    %27 = arith.cmpi sge, %21, %26 : vector<8x16x1xi32>
    %28 = vector.broadcast %9 : vector<8x1x1xi32> to vector<8x16x1xi32>
    %29 = arith.cmpi slt, %21, %28 : vector<8x16x1xi32>
    %30 = arith.andi %27, %29 : vector<8x16x1xi1>
    %31 = arith.extui %30 : vector<8x16x1xi1> to vector<8x16x1xi32>
    %32 = arith.sitofp %31 : vector<8x16x1xi32> to vector<8x16x1xf32>
    %33 = vector.broadcast %14 : vector<8x1x1xf32> to vector<8x16x1xf32>
    %34 = arith.mulf %33, %25 : vector<8x16x1xf32>
    %35 = vector.broadcast %20 : vector<8x1x1xf32> to vector<8x16x1xf32>
    %36 = arith.mulf %35, %32 : vector<8x16x1xf32>
    %37 = arith.addf %34, %36 : vector<8x16x1xf32>
    %cst_5 = arith.constant 5.000000e-01 : f32
    %38 = vector.broadcast %cst_5 : f32 to vector<8x16x1xf32>
    %39 = arith.mulf %38, %37 : vector<8x16x1xf32>
    %c0_6 = arith.constant 0 : index
    %c0_7 = arith.constant 0 : index
    %40 = vector.load %arg5[%c0_6, %c0_7] : memref<2x128xf32, #tpu.memory_space<vmem>>, vector<2x128xf32>
    %41 = vector.extract_strided_slice %40 {offsets = [0, 0], sizes = [1, 128], strides = [1, 1]} : vector<2x128xf32> to vector<1x128xf32>
    %42 = vector.extract_strided_slice %40 {offsets = [1, 0], sizes = [1, 1], strides = [1, 1]} : vector<2x128xf32> to vector<1x1xf32>
    %c0_8 = arith.constant 0 : index
    %c0_9 = arith.constant 0 : index
    %c0_10 = arith.constant 0 : index
    %43 = vector.load %arg2[%c0_8, %c0_9, %c0_10] : memref<8x16x128xbf16, #tpu.memory_space<vmem>>, vector<8x16x128xbf16>
    %44 = arith.extf %43 : vector<8x16x128xbf16> to vector<8x16x128xf32>
    %45 = vector.broadcast %39 : vector<8x16x1xf32> to vector<8x16x128xf32>
    %46 = arith.mulf %44, %45 : vector<8x16x128xf32>
    %cst_11 = arith.constant dense<0.000000e+00> : vector<8x128xf32>
    %47 = vector.multi_reduction <add>, %46, %cst_11 [1] : vector<8x16x128xf32> to vector<8x128xf32>
    %48 = vector.shape_cast %47 : vector<8x128xf32> to vector<8x1x128xf32>
    %49 = vector.shape_cast %41 : vector<1x128xf32> to vector<1x1x128xf32>
    %50 = vector.broadcast %49 : vector<1x1x128xf32> to vector<8x1x128xf32>
    %51 = arith.mulf %48, %50 : vector<8x1x128xf32>
    %cst_12 = arith.constant dense<0.000000e+00> : vector<8x1xf32>
    %52 = vector.multi_reduction <add>, %51, %cst_12 [2] : vector<8x1x128xf32> to vector<8x1xf32>
    %53 = vector.shape_cast %52 : vector<8x1xf32> to vector<8x1x1xf32>
    %54 = vector.shape_cast %42 : vector<1x1xf32> to vector<1x1x1xf32>
    %55 = vector.broadcast %54 : vector<1x1x1xf32> to vector<8x1x1xf32>
    %56 = arith.addf %53, %55 : vector<8x1x1xf32>
    %c0_13 = arith.constant 0 : index
    %c0_14 = arith.constant 0 : index
    %c0_15 = arith.constant 0 : index
    %57 = vector.load %arg3[%c0_13, %c0_14, %c0_15] : memref<8x16x128xbf16, #tpu.memory_space<vmem>>, vector<8x16x128xbf16>
    %58 = arith.extf %57 : vector<8x16x128xbf16> to vector<8x16x128xf32>
    %59 = vector.broadcast %39 : vector<8x16x1xf32> to vector<8x16x128xf32>
    %60 = arith.mulf %58, %59 : vector<8x16x128xf32>
    %cst_16 = arith.constant dense<0.000000e+00> : vector<8x128xf32>
    %61 = vector.multi_reduction <add>, %60, %cst_16 [1] : vector<8x16x128xf32> to vector<8x128xf32>
    %62 = vector.shape_cast %61 : vector<8x128xf32> to vector<8x1x128xf32>
    %63 = vector.shape_cast %41 : vector<1x128xf32> to vector<1x1x128xf32>
    %64 = vector.broadcast %63 : vector<1x1x128xf32> to vector<8x1x128xf32>
    %65 = arith.mulf %62, %64 : vector<8x1x128xf32>
    %cst_17 = arith.constant dense<0.000000e+00> : vector<8x1xf32>
    %66 = vector.multi_reduction <add>, %65, %cst_17 [2] : vector<8x1x128xf32> to vector<8x1xf32>
    %67 = vector.shape_cast %66 : vector<8x1xf32> to vector<8x1x1xf32>
    %68 = vector.shape_cast %42 : vector<1x1xf32> to vector<1x1x1xf32>
    %69 = vector.broadcast %68 : vector<1x1x1xf32> to vector<8x1x1xf32>
    %70 = arith.addf %67, %69 : vector<8x1x1xf32>
    %71 = tpu.iota {dimensions = array<i32: 1>} : vector<8x8x1xi32>
    %c0_18 = arith.constant 0 : index
    %c0_19 = arith.constant 0 : index
    %c0_20 = arith.constant 0 : index
    %c0_21 = arith.constant 0 : index
    %72 = vector.load %arg4[%c0_18, %c0_19, %c0_20, %c0_21] : memref<3x8x8x128xbf16, #tpu.memory_space<vmem>>, vector<1x8x8x128xbf16>
    %73 = vector.shape_cast %72 : vector<1x8x8x128xbf16> to vector<8x8x128xbf16>
    %74 = arith.extf %73 : vector<8x8x128xbf16> to vector<8x8x128xf32>
    %75 = vector.extract_strided_slice %0 {offsets = [0, 2, 0], sizes = [8, 1, 1], strides = [1, 1, 1]} : vector<8x8x1xi32> to vector<8x1x1xi32>
    %76 = vector.broadcast %75 : vector<8x1x1xi32> to vector<8x8x1xi32>
    %77 = arith.cmpi slt, %71, %76 : vector<8x8x1xi32>
    %78 = arith.extui %77 : vector<8x8x1xi1> to vector<8x8x1xi32>
    %79 = arith.sitofp %78 : vector<8x8x1xi32> to vector<8x8x1xf32>
    %c1_i32_22 = arith.constant 1 : i32
    %80 = vector.broadcast %c1_i32_22 : i32 to vector<8x1x1xi32>
    %81 = arith.maxsi %75, %80 : vector<8x1x1xi32>
    %82 = arith.sitofp %81 : vector<8x1x1xi32> to vector<8x1x1xf32>
    %cst_23 = arith.constant 1.000000e+00 : f32
    %83 = vector.broadcast %cst_23 : f32 to vector<8x1x1xf32>
    %84 = arith.divf %83, %82 : vector<8x1x1xf32>
    %85 = vector.broadcast %79 : vector<8x8x1xf32> to vector<8x8x128xf32>
    %86 = arith.mulf %74, %85 : vector<8x8x128xf32>
    %cst_24 = arith.constant dense<0.000000e+00> : vector<8x128xf32>
    %87 = vector.multi_reduction <add>, %86, %cst_24 [1] : vector<8x8x128xf32> to vector<8x128xf32>
    %88 = vector.shape_cast %87 : vector<8x128xf32> to vector<8x1x128xf32>
    %89 = vector.broadcast %84 : vector<8x1x1xf32> to vector<8x1x128xf32>
    %90 = arith.mulf %88, %89 : vector<8x1x128xf32>
    %c1 = arith.constant 1 : index
    %c0_25 = arith.constant 0 : index
    %c0_26 = arith.constant 0 : index
    %c0_27 = arith.constant 0 : index
    %91 = vector.load %arg4[%c1, %c0_25, %c0_26, %c0_27] : memref<3x8x8x128xbf16, #tpu.memory_space<vmem>>, vector<1x8x8x128xbf16>
    %92 = vector.shape_cast %91 : vector<1x8x8x128xbf16> to vector<8x8x128xbf16>
    %93 = arith.extf %92 : vector<8x8x128xbf16> to vector<8x8x128xf32>
    %94 = vector.extract_strided_slice %0 {offsets = [0, 3, 0], sizes = [8, 1, 1], strides = [1, 1, 1]} : vector<8x8x1xi32> to vector<8x1x1xi32>
    %95 = vector.broadcast %94 : vector<8x1x1xi32> to vector<8x8x1xi32>
    %96 = arith.cmpi slt, %71, %95 : vector<8x8x1xi32>
    %97 = arith.extui %96 : vector<8x8x1xi1> to vector<8x8x1xi32>
    %98 = arith.sitofp %97 : vector<8x8x1xi32> to vector<8x8x1xf32>
    %c1_i32_28 = arith.constant 1 : i32
    %99 = vector.broadcast %c1_i32_28 : i32 to vector<8x1x1xi32>
    %100 = arith.maxsi %94, %99 : vector<8x1x1xi32>
    %101 = arith.sitofp %100 : vector<8x1x1xi32> to vector<8x1x1xf32>
    %cst_29 = arith.constant 1.000000e+00 : f32
    %102 = vector.broadcast %cst_29 : f32 to vector<8x1x1xf32>
    %103 = arith.divf %102, %101 : vector<8x1x1xf32>
    %104 = vector.broadcast %98 : vector<8x8x1xf32> to vector<8x8x128xf32>
    %105 = arith.mulf %93, %104 : vector<8x8x128xf32>
    %cst_30 = arith.constant dense<0.000000e+00> : vector<8x128xf32>
    %106 = vector.multi_reduction <add>, %105, %cst_30 [1] : vector<8x8x128xf32> to vector<8x128xf32>
    %107 = vector.shape_cast %106 : vector<8x128xf32> to vector<8x1x128xf32>
    %108 = vector.broadcast %103 : vector<8x1x1xf32> to vector<8x1x128xf32>
    %109 = arith.mulf %107, %108 : vector<8x1x128xf32>
    %c2 = arith.constant 2 : index
    %c0_31 = arith.constant 0 : index
    %c0_32 = arith.constant 0 : index
    %c0_33 = arith.constant 0 : index
    %110 = vector.load %arg4[%c2, %c0_31, %c0_32, %c0_33] : memref<3x8x8x128xbf16, #tpu.memory_space<vmem>>, vector<1x8x8x128xbf16>
    %111 = vector.shape_cast %110 : vector<1x8x8x128xbf16> to vector<8x8x128xbf16>
    %112 = arith.extf %111 : vector<8x8x128xbf16> to vector<8x8x128xf32>
    %113 = vector.extract_strided_slice %0 {offsets = [0, 4, 0], sizes = [8, 1, 1], strides = [1, 1, 1]} : vector<8x8x1xi32> to vector<8x1x1xi32>
    %114 = vector.broadcast %113 : vector<8x1x1xi32> to vector<8x8x1xi32>
    %115 = arith.cmpi slt, %71, %114 : vector<8x8x1xi32>
    %116 = arith.extui %115 : vector<8x8x1xi1> to vector<8x8x1xi32>
    %117 = arith.sitofp %116 : vector<8x8x1xi32> to vector<8x8x1xf32>
    %c1_i32_34 = arith.constant 1 : i32
    %118 = vector.broadcast %c1_i32_34 : i32 to vector<8x1x1xi32>
    %119 = arith.maxsi %113, %118 : vector<8x1x1xi32>
    %120 = arith.sitofp %119 : vector<8x1x1xi32> to vector<8x1x1xf32>
    %cst_35 = arith.constant 1.000000e+00 : f32
    %121 = vector.broadcast %cst_35 : f32 to vector<8x1x1xf32>
    %122 = arith.divf %121, %120 : vector<8x1x1xf32>
    %123 = vector.broadcast %117 : vector<8x8x1xf32> to vector<8x8x128xf32>
    %124 = arith.mulf %112, %123 : vector<8x8x128xf32>
    %cst_36 = arith.constant dense<0.000000e+00> : vector<8x128xf32>
    %125 = vector.multi_reduction <add>, %124, %cst_36 [1] : vector<8x8x128xf32> to vector<8x128xf32>
    %126 = vector.shape_cast %125 : vector<8x128xf32> to vector<8x1x128xf32>
    %127 = vector.broadcast %122 : vector<8x1x1xf32> to vector<8x1x128xf32>
    %128 = arith.mulf %126, %127 : vector<8x1x128xf32>
    %129 = arith.mulf %90, %90 : vector<8x1x128xf32>
    %cst_37 = arith.constant dense<0.000000e+00> : vector<8x1xf32>
    %130 = vector.multi_reduction <add>, %129, %cst_37 [2] : vector<8x1x128xf32> to vector<8x1xf32>
    %131 = vector.shape_cast %130 : vector<8x1xf32> to vector<8x1x1xf32>
    %cst_38 = arith.constant 1.000000e-16 : f32
    %132 = vector.broadcast %cst_38 : f32 to vector<8x1x1xf32>
    %133 = arith.maximumf %131, %132 : vector<8x1x1xf32>
    %134 = math.rsqrt %133 : vector<8x1x1xf32>
    %135 = arith.mulf %90, %109 : vector<8x1x128xf32>
    %cst_39 = arith.constant dense<0.000000e+00> : vector<8x1xf32>
    %136 = vector.multi_reduction <add>, %135, %cst_39 [2] : vector<8x1x128xf32> to vector<8x1xf32>
    %137 = vector.shape_cast %136 : vector<8x1xf32> to vector<8x1x1xf32>
    %138 = arith.mulf %137, %134 : vector<8x1x1xf32>
    %139 = arith.mulf %109, %109 : vector<8x1x128xf32>
    %cst_40 = arith.constant dense<0.000000e+00> : vector<8x1xf32>
    %140 = vector.multi_reduction <add>, %139, %cst_40 [2] : vector<8x1x128xf32> to vector<8x1xf32>
    %141 = vector.shape_cast %140 : vector<8x1xf32> to vector<8x1x1xf32>
    %cst_41 = arith.constant 1.000000e-16 : f32
    %142 = vector.broadcast %cst_41 : f32 to vector<8x1x1xf32>
    %143 = arith.maximumf %141, %142 : vector<8x1x1xf32>
    %144 = math.rsqrt %143 : vector<8x1x1xf32>
    %145 = arith.mulf %138, %144 : vector<8x1x1xf32>
    %146 = arith.addf %56, %145 : vector<8x1x1xf32>
    %147 = arith.mulf %90, %128 : vector<8x1x128xf32>
    %cst_42 = arith.constant dense<0.000000e+00> : vector<8x1xf32>
    %148 = vector.multi_reduction <add>, %147, %cst_42 [2] : vector<8x1x128xf32> to vector<8x1xf32>
    %149 = vector.shape_cast %148 : vector<8x1xf32> to vector<8x1x1xf32>
    %150 = arith.mulf %149, %134 : vector<8x1x1xf32>
    %151 = arith.mulf %128, %128 : vector<8x1x128xf32>
    %cst_43 = arith.constant dense<0.000000e+00> : vector<8x1xf32>
    %152 = vector.multi_reduction <add>, %151, %cst_43 [2] : vector<8x1x128xf32> to vector<8x1xf32>
    %153 = vector.shape_cast %152 : vector<8x1xf32> to vector<8x1x1xf32>
    %cst_44 = arith.constant 1.000000e-16 : f32
    %154 = vector.broadcast %cst_44 : f32 to vector<8x1x1xf32>
    %155 = arith.maximumf %153, %154 : vector<8x1x1xf32>
    %156 = math.rsqrt %155 : vector<8x1x1xf32>
    %157 = arith.mulf %150, %156 : vector<8x1x1xf32>
    %158 = arith.addf %70, %157 : vector<8x1x1xf32>
    %159 = vector.extract_strided_slice %0 {offsets = [0, 5, 0], sizes = [8, 1, 1], strides = [1, 1, 1]} : vector<8x8x1xi32> to vector<8x1x1xi32>
    %c0_i32 = arith.constant 0 : i32
    %160 = vector.broadcast %c0_i32 : i32 to vector<8x1x1xi32>
    %161 = arith.cmpi sgt, %159, %160 : vector<8x1x1xi32>
    %162 = arith.extui %161 : vector<8x1x1xi1> to vector<8x1x1xi32>
    %163 = arith.sitofp %162 : vector<8x1x1xi32> to vector<8x1x1xf32>
    %164 = arith.subf %146, %158 : vector<8x1x1xf32>
    %cst_45 = arith.constant 1.000000e+00 : f32
    %165 = vector.broadcast %cst_45 : f32 to vector<8x1x1xf32>
    %166 = arith.subf %165, %164 : vector<8x1x1xf32>
    %cst_46 = arith.constant 0.000000e+00 : f32
    %167 = vector.broadcast %cst_46 : f32 to vector<8x1x1xf32>
    %168 = arith.maximumf %166, %167 : vector<8x1x1xf32>
    %169 = arith.mulf %168, %163 : vector<8x1x1xf32>
    %170 = vector.shape_cast %169 : vector<8x1x1xf32> to vector<1x8x1x1xf32>
    %cst_47 = arith.constant dense<0.000000e+00> : vector<1xf32>
    %171 = vector.multi_reduction <add>, %170, %cst_47 [1, 2, 3] : vector<1x8x1x1xf32> to vector<1xf32>
    %172 = vector.shape_cast %171 : vector<1xf32> to vector<1x1x1x1xf32>
    %173 = vector.extract %172[0, 0, 0, 0] : f32 from vector<1x1x1x1xf32>
    %174 = vector.broadcast %173 : f32 to vector<1x8x128xf32>
    %c0_48 = arith.constant 0 : index
    %c0_49 = arith.constant 0 : index
    %c0_50 = arith.constant 0 : index
    %175 = vector.load %arg6[%c0_48, %c0_49, %c0_50] : memref<1x8x128xf32, #tpu.memory_space<vmem>>, vector<1x8x128xf32>
    tpu.vector_store %arg6[%c0_48, %c0_49, %c0_50], %174 {strides = array<i32>} : memref<1x8x128xf32, #tpu.memory_space<vmem>>, vector<1x8x128xf32>,
    return
  }
  func.func @transform_0(%arg0: i32) -> (i32, i32, i32) {
    %c0_i32 = arith.constant 0 : i32
    %c0_i32_0 = arith.constant 0 : i32
    %c0_i32_1 = arith.constant 0 : i32
    return %arg0, %c0_i32, %c0_i32_0 : i32, i32, i32
  }
  func.func @transform_1(%arg0: i32) -> (i32, i32, i32) {
    %c0_i32 = arith.constant 0 : i32
    %c0_i32_0 = arith.constant 0 : i32
    %c0_i32_1 = arith.constant 0 : i32
    return %arg0, %c0_i32, %c0_i32_0 : i32, i32, i32
  }
  func.func @transform_2(%arg0: i32) -> (i32, i32, i32) {
    %c0_i32 = arith.constant 0 : i32
    %c0_i32_0 = arith.constant 0 : i32
    %c0_i32_1 = arith.constant 0 : i32
    return %arg0, %c0_i32, %c0_i32_0 : i32, i32, i32
  }
  func.func @transform_3(%arg0: i32) -> (i32, i32, i32, i32) {
    %c0_i32 = arith.constant 0 : i32
    %c0_i32_0 = arith.constant 0 : i32
    %c0_i32_1 = arith.constant 0 : i32
    %c0_i32_2 = arith.constant 0 : i32
    return %c0_i32, %arg0, %c0_i32_0, %c0_i32_1 : i32, i32, i32, i32
  }
  func.func @transform_4(%arg0: i32) -> (i32, i32) {
    %c0_i32 = arith.constant 0 : i32
    %c0_i32_0 = arith.constant 0 : i32
    %c0_i32_1 = arith.constant 0 : i32
    return %c0_i32, %c0_i32_0 : i32, i32
  }
  func.func @transform_5(%arg0: i32) -> (i32, i32, i32) {
    %c0_i32 = arith.constant 0 : i32
    %c0_i32_0 = arith.constant 0 : i32
    %c0_i32_1 = arith.constant 0 : i32
    return %arg0, %c0_i32, %c0_i32_0 : i32, i32, i32
  }
}

</mosaic_0001>

<llo_original>
// kernel: seg_model_forward.1
$region0: #{seg_model_forward.1}
  #allocation0 [shape = 'u32[]', space=smem, size = 0x4, offset = 0x4, fixed_abs, tag = 'smem constant byte address 0x4 - core index']
  #allocation1 [shape = 'u32[72,128]{1,0:T(1,128)}', space=vmem, size = 0x9000, scoped, tag = 'internal scratch']
  %s0 = inlined_call_operand.vmem [shape: s32[8,8,1], index: 0, kind: input, shape index: {}]
  %s1 = inlined_call_operand.vmem [shape: bf16[8,16,128], index: 1, kind: input, shape index: {}]
  %s2 = inlined_call_operand.hbm [shape: bf16[8,16,128], index: 2, kind: input, shape index: {}]
  %s3 = inlined_call_operand.hbm [shape: bf16[3,8,8,128], index: 3, kind: input, shape index: {}]
  %s4 = inlined_call_operand.vmem [shape: f32[2,128], index: 4, kind: input, shape index: {}]
  %s5 = inlined_call_operand.vmem [shape: f32[1,8,128], index: 5, kind: output, shape index: {}]
  %s6 = sld [smem:[#allocation0]]
  $region38: #{seg_model_forward.1} parent=0
    _
  %s8 = ssub.s32 1, %s6
  %s9 = scalar_select 0, %s8, %s6
  $region1: #{seg_model_forward.1} parent=0
    #allocation2 [shape = 'u8[32768]{0}', space=vmem, size = 0x8000, scoped, tag = 'input window, operand 2, single buffered']
    #allocation3 [shape = 's32[1]{0}', space=sflag, size = 0x4, scoped, tag = 'scoped memory for seg_model_forward.1']
    #allocation4 [shape = 'u8[49152]{0}', space=vmem, size = 0xc000, scoped, tag = 'input window, operand 3, single buffered']
    #allocation5 [shape = 's32[1]{0}', space=sflag, size = 0x4, scoped, tag = 'scoped memory for seg_model_forward.1']
    %10 = vsyncpa [#allocation3], 0
    %11 = vsyncpa [#allocation5], 0
    // Predicated region
    $region2: #{seg_model_forward.1} parent=1 // pred_check
      _
    $region3: #{seg_model_forward.1} parent=1 // pred_check_branch
      %13 = sbr.rel (0) target = $region5
    $region4: #{seg_model_forward.1} parent=1 // pred_region
      _
    $region5: #{seg_model_forward.1} parent=1 // pred_fallthru
      _
    // Predicated region
    $region6: #{seg_model_forward.1} parent=1 // pred_check
      _
    $region7: #{seg_model_forward.1} parent=1 // pred_check_branch
      %15 = sbr.rel (0) target = $region9
    $region8: #{seg_model_forward.1} parent=1 // pred_region
      _
    $region9: #{seg_model_forward.1} parent=1 // pred_fallthru
      _
    // Predicated region
    $region10: #{seg_model_forward.1} parent=1 // pred_check
      _
    $region11: #{seg_model_forward.1} parent=1 // pred_check_branch
      %17 = sbr.rel (0) target = $region13
    $region12: #{seg_model_forward.1} parent=1 // pred_region
      %19 = vsyncadd [#allocation3], 0
      %s20 = sshll.u32 %s2, 4
      %s21 = int_to_ptr.hbm [resolvable:$true] %s20
      %s22 = sshll.u32 [#allocation2], 4
      %s23 = int_to_ptr.vmem [resolvable:$true] %s22
      %28 = dma.hbm_to_vmem [thread:$0]  %s21, 1024, %s23, [#allocation3], 64, 64, 4
    $region13: #{seg_model_forward.1} parent=1 // pred_fallthru
      _
    // Predicated region
    $region14: #{seg_model_forward.1} parent=1 // pred_check
      _
    $region15: #{seg_model_forward.1} parent=1 // pred_check_branch
      %30 = sbr.rel (0) target = $region17
    $region16: #{seg_model_forward.1} parent=1 // pred_region
      %32 = vsyncadd [#allocation5], 0
      %s33 = sshll.u32 %s3, 4
      %s34 = int_to_ptr.hbm [resolvable:$true] %s33
      %s35 = sshll.u32 [#allocation4], 4
      %s36 = int_to_ptr.vmem [resolvable:$true] %s35
      %41 = dma.hbm_to_vmem [thread:$0]  %s34, 1536, %s36, [#allocation5], 64, 64, 4
    $region17: #{seg_model_forward.1} parent=1 // pred_fallthru
      _
    // Predicated region
    $region18: #{seg_model_forward.1} parent=1 // pred_check
      _
    $region19: #{seg_model_forward.1} parent=1 // pred_check_branch
      %43 = sbr.rel (0) target = $region21
    $region20: #{seg_model_forward.1} parent=1 // pred_region
      _
    $region21: #{seg_model_forward.1} parent=1 // pred_fallthru
      _
    // Predicated region
    $region22: #{seg_model_forward.1} parent=1 // pred_check
      _
    $region23: #{seg_model_forward.1} parent=1 // pred_check_branch
      %45 = sbr.rel (0) target = $region25
    $region24: #{seg_model_forward.1} parent=1 // pred_region
      %47 = dma.done [#allocation3], 1024
    $region25: #{seg_model_forward.1} parent=1 // pred_fallthru
      _
    // Predicated region
    $region26: #{seg_model_forward.1} parent=1 // pred_check
      _
    $region27: #{seg_model_forward.1} parent=1 // pred_check_branch
      %49 = sbr.rel (0) target = $region29
    $region28: #{seg_model_forward.1} parent=1 // pred_region
      %51 = dma.done [#allocation5], 1536
    $region29: #{seg_model_forward.1} parent=1 // pred_fallthru
      _
    %v52 = vld [vmem:[%s0] sm:$0xff]
    %v53 = vld [vmem:[%s0 + $0x8] sm:$0xff]
    %v54 = vld [vmem:[%s0 + $0x10] sm:$0xff]
    %v55 = vld [vmem:[%s0 + $0x18] sm:$0xff]
    %v56 = vld [vmem:[%s0 + $0x20] sm:$0xff]
    %v57 = vld [vmem:[%s0 + $0x28] sm:$0xff]
    %v58 = vld [vmem:[%s0 + $0x30] sm:$0xff]
    %v59 = vld [vmem:[%s0 + $0x38] sm:$0xff]
    %vm60 = vcmp.lt.s32.totalorder %v52, 124
    %v61 = vsel %vm60, %v52, 124
    %vm62 = vcmp.lt.s32.totalorder %v53, 124
    %v63 = vsel %vm62, %v53, 124
    %vm64 = vcmp.lt.s32.totalorder %v54, 124
    %v65 = vsel %vm64, %v54, 124
    %vm66 = vcmp.lt.s32.totalorder %v55, 124
    %v67 = vsel %vm66, %v55, 124
    %vm68 = vcmp.lt.s32.totalorder %v56, 124
    %v69 = vsel %vm68, %v56, 124
    %vm70 = vcmp.lt.s32.totalorder %v57, 124
    %v71 = vsel %vm70, %v57, 124
    %vm72 = vcmp.lt.s32.totalorder %v58, 124
    %v73 = vsel %vm72, %v58, 124
    %vm74 = vcmp.lt.s32.totalorder %v59, 124
    %v75 = vsel %vm74, %v59, 124
    %vm76 = vcmp.lt.s32.totalorder %v61, 16
    %v77 = vsel %vm76, %v61, 16
    %vm78 = vcmp.lt.s32.totalorder %v63, 16
    %v79 = vsel %vm78, %v63, 16
    %vm80 = vcmp.lt.s32.totalorder %v65, 16
    %v81 = vsel %vm80, %v65, 16
    %vm82 = vcmp.lt.s32.totalorder %v67, 16
    %v83 = vsel %vm82, %v67, 16
    %vm84 = vcmp.lt.s32.totalorder %v69, 16
    %v85 = vsel %vm84, %v69, 16
    %vm86 = vcmp.lt.s32.totalorder %v71, 16
    %v87 = vsel %vm86, %v71, 16
    %vm88 = vcmp.lt.s32.totalorder %v73, 16
    %v89 = vsel %vm88, %v73, 16
    %vm90 = vcmp.lt.s32.totalorder %v75, 16
    %v91 = vsel %vm90, %v75, 16
    %v92 = vrot.slane %v52, 1
    %v93 = vrot.slane %v53, 1
    %v94 = vrot.slane %v54, 1
    %v95 = vrot.slane %v55, 1
    %v96 = vrot.slane %v56, 1
    %v97 = vrot.slane %v57, 1
    %v98 = vrot.slane %v58, 1
    %v99 = vrot.slane %v59, 1
    %v100 = vadd.s32 %v52, %v92
    %v101 = vadd.s32 %v53, %v93
    %v102 = vadd.s32 %v54, %v94
    %v103 = vadd.s32 %v55, %v95
    %v104 = vadd.s32 %v56, %v96
    %v105 = vadd.s32 %v57, %v97
    %v106 = vadd.s32 %v58, %v98
    %v107 = vadd.s32 %v59, %v99
    %vm108 = vcmp.lt.s32.totalorder %v100, 16
    %v109 = vsel %vm108, %v100, 16
    %vm110 = vcmp.lt.s32.totalorder %v101, 16
    %v111 = vsel %vm110, %v101, 16
    %vm112 = vcmp.lt.s32.totalorder %v102, 16
    %v113 = vsel %vm112, %v102, 16
    %vm114 = vcmp.lt.s32.totalorder %v103, 16
    %v115 = vsel %vm114, %v103, 16
    %vm116 = vcmp.lt.s32.totalorder %v104, 16
    %v117 = vsel %vm116, %v104, 16
    %vm118 = vcmp.lt.s32.totalorder %v105, 16
    %v119 = vsel %vm118, %v105, 16
    %vm120 = vcmp.lt.s32.totalorder %v106, 16
    %v121 = vsel %vm120, %v106, 16
    %vm122 = vcmp.lt.s32.totalorder %v107, 16
    %v123 = vsel %vm122, %v107, 16
    %vm124 = vcmp.gt.s32.totalorder %v77, 1
    %v125 = vsel %vm124, %v77, 1
    %vm126 = vcmp.gt.s32.totalorder %v79, 1
    %v127 = vsel %vm126, %v79, 1
    %vm128 = vcmp.gt.s32.totalorder %v81, 1
    %v129 = vsel %vm128, %v81, 1
    %vm130 = vcmp.gt.s32.totalorder %v83, 1
    %v131 = vsel %vm130, %v83, 1
    %vm132 = vcmp.gt.s32.totalorder %v85, 1
    %v133 = vsel %vm132, %v85, 1
    %vm134 = vcmp.gt.s32.totalorder %v87, 1
    %v135 = vsel %vm134, %v87, 1
    %vm136 = vcmp.gt.s32.totalorder %v89, 1
    %v137 = vsel %vm136, %v89, 1
    %vm138 = vcmp.gt.s32.totalorder %v91, 1
    %v139 = vsel %vm138, %v91, 1
    %v140 = vcvt.s32.f32 %v125
    %v141 = vcvt.s32.f32 %v127
    %v142 = vcvt.s32.f32 %v129
    %v143 = vcvt.s32.f32 %v131
    %v144 = vcvt.s32.f32 %v133
    %v145 = vcvt.s32.f32 %v135
    %v146 = vcvt.s32.f32 %v137
    %v147 = vcvt.s32.f32 %v139
    %v148 = vrcp.pop %v140
    %v149 = vmul.f32 %v140, %v148
    %v150 = vsub.f32 1.0, %v149
    %v151 = vmul.f32 %v148, %v150
    %v152 = vadd.f32 %v148, %v151
    %vm153 = vweird.f32 %v140
    %vm154 = vweird.f32 %v148
    %vm155 = vmor %vm153, %vm154
    %v156 = vsel %vm155, %v148, %v152
    %v157 = vand.u32 2147483647, %v140
    %vm158 = vcmp.eq.f32.partialorder %v157, 8.507059e+37
    %v159 = vand.u32 %v140, 2147483648
    %v160 = vor.u32 1.1754944e-38, %v159
    %v161 = vsel %vm158, %v160, %v156
    %v162 = vmul.f32 1.0, %v161
    %v163 = vrcp.pop %v141
    %v164 = vmul.f32 %v141, %v163
    %v165 = vsub.f32 1.0, %v164
    %v166 = vmul.f32 %v163, %v165
    %v167 = vadd.f32 %v163, %v166
    %vm168 = vweird.f32 %v141
    %vm169 = vweird.f32 %v163
    %vm170 = vmor %vm168, %vm169
    %v171 = vsel %vm170, %v163, %v167
    %v172 = vand.u32 2147483647, %v141
    %vm173 = vcmp.eq.f32.partialorder %v172, 8.507059e+37
    %v174 = vand.u32 %v141, 2147483648
    %v175 = vor.u32 1.1754944e-38, %v174
    %v176 = vsel %vm173, %v175, %v171
    %v177 = vmul.f32 1.0, %v176
    %v178 = vrcp.pop %v142
    %v179 = vmul.f32 %v142, %v178
    %v180 = vsub.f32 1.0, %v179
    %v181 = vmul.f32 %v178, %v180
    %v182 = vadd.f32 %v178, %v181
    %vm183 = vweird.f32 %v142
    %vm184 = vweird.f32 %v178
    %vm185 = vmor %vm183, %vm184
    %v186 = vsel %vm185, %v178, %v182
    %v187 = vand.u32 2147483647, %v142
    %vm188 = vcmp.eq.f32.partialorder %v187, 8.507059e+37
    %v189 = vand.u32 %v142, 2147483648
    %v190 = vor.u32 1.1754944e-38, %v189
    %v191 = vsel %vm188, %v190, %v186
    %v192 = vmul.f32 1.0, %v191
    %v193 = vrcp.pop %v143
    %v194 = vmul.f32 %v143, %v193
    %v195 = vsub.f32 1.0, %v194
    %v196 = vmul.f32 %v193, %v195
    %v197 = vadd.f32 %v193, %v196
    %vm198 = vweird.f32 %v143
    %vm199 = vweird.f32 %v193
    %vm200 = vmor %vm198, %vm199
    %v201 = vsel %vm200, %v193, %v197
    %v202 = vand.u32 2147483647, %v143
    %vm203 = vcmp.eq.f32.partialorder %v202, 8.507059e+37
    %v204 = vand.u32 %v143, 2147483648
    %v205 = vor.u32 1.1754944e-38, %v204
    %v206 = vsel %vm203, %v205, %v201
    %v207 = vmul.f32 1.0, %v206
    %v208 = vrcp.pop %v144
    %v209 = vmul.f32 %v144, %v208
    %v210 = vsub.f32 1.0, %v209
    %v211 = vmul.f32 %v208, %v210
    %v212 = vadd.f32 %v208, %v211
    %vm213 = vweird.f32 %v144
    %vm214 = vweird.f32 %v208
    %vm215 = vmor %vm213, %vm214
    %v216 = vsel %vm215, %v208, %v212
    %v217 = vand.u32 2147483647, %v144
    %vm218 = vcmp.eq.f32.partialorder %v217, 8.507059e+37
    %v219 = vand.u32 %v144, 2147483648
    %v220 = vor.u32 1.1754944e-38, %v219
    %v221 = vsel %vm218, %v220, %v216
    %v222 = vmul.f32 1.0, %v221
    %v223 = vrcp.pop %v145
    %v224 = vmul.f32 %v145, %v223
    %v225 = vsub.f32 1.0, %v224
    %v226 = vmul.f32 %v223, %v225
    %v227 = vadd.f32 %v223, %v226
    %vm228 = vweird.f32 %v145
    %vm229 = vweird.f32 %v223
    %vm230 = vmor %vm228, %vm229
    %v231 = vsel %vm230, %v223, %v227
    %v232 = vand.u32 2147483647, %v145
    %vm233 = vcmp.eq.f32.partialorder %v232, 8.507059e+37
    %v234 = vand.u32 %v145, 2147483648
    %v235 = vor.u32 1.1754944e-38, %v234
    %v236 = vsel %vm233, %v235, %v231
    %v237 = vmul.f32 1.0, %v236
    %v238 = vrcp.pop %v146
    %v239 = vmul.f32 %v146, %v238
    %v240 = vsub.f32 1.0, %v239
    %v241 = vmul.f32 %v238, %v240
    %v242 = vadd.f32 %v238, %v241
    %vm243 = vweird.f32 %v146
    %vm244 = vweird.f32 %v238
    %vm245 = vmor %vm243, %vm244
    %v246 = vsel %vm245, %v238, %v242
    %v247 = vand.u32 2147483647, %v146
    %vm248 = vcmp.eq.f32.partialorder %v247, 8.507059e+37
    %v249 = vand.u32 %v146, 2147483648
    %v250 = vor.u32 1.1754944e-38, %v249
    %v251 = vsel %vm248, %v250, %v246
    %v252 = vmul.f32 1.0, %v251
    %v253 = vrcp.pop %v147
    %v254 = vmul.f32 %v147, %v253
    %v255 = vsub.f32 1.0, %v254
    %v256 = vmul.f32 %v253, %v255
    %v257 = vadd.f32 %v253, %v256
    %vm258 = vweird.f32 %v147
    %vm259 = vweird.f32 %v253
    %vm260 = vmor %vm258, %vm259
    %v261 = vsel %vm260, %v253, %v257
    %v262 = vand.u32 2147483647, %v147
    %vm263 = vcmp.eq.f32.partialorder %v262, 8.507059e+37
    %v264 = vand.u32 %v147, 2147483648
    %v265 = vor.u32 1.1754944e-38, %v264
    %v266 = vsel %vm263, %v265, %v261
    %v267 = vmul.f32 1.0, %v266
    %v268 = vsub.s32 %v109, %v77
    %v269 = vsub.s32 %v111, %v79
    %v270 = vsub.s32 %v113, %v81
    %v271 = vsub.s32 %v115, %v83
    %v272 = vsub.s32 %v117, %v85
    %v273 = vsub.s32 %v119, %v87
    %v274 = vsub.s32 %v121, %v89
    %v275 = vsub.s32 %v123, %v91
    %vm276 = vcmp.gt.s32.totalorder %v268, 1
    %v277 = vsel %vm276, %v268, 1
    %vm278 = vcmp.gt.s32.totalorder %v269, 1
    %v279 = vsel %vm278, %v269, 1
    %vm280 = vcmp.gt.s32.totalorder %v270, 1
    %v281 = vsel %vm280, %v270, 1
    %vm282 = vcmp.gt.s32.totalorder %v271, 1
    %v283 = vsel %vm282, %v271, 1
    %vm284 = vcmp.gt.s32.totalorder %v272, 1
    %v285 = vsel %vm284, %v272, 1
    %vm286 = vcmp.gt.s32.totalorder %v273, 1
    %v287 = vsel %vm286, %v273, 1
    %vm288 = vcmp.gt.s32.totalorder %v274, 1
    %v289 = vsel %vm288, %v274, 1
    %vm290 = vcmp.gt.s32.totalorder %v275, 1
    %v291 = vsel %vm290, %v275, 1
    %v292 = vcvt.s32.f32 %v277
    %v293 = vcvt.s32.f32 %v279
    %v294 = vcvt.s32.f32 %v281
    %v295 = vcvt.s32.f32 %v283
    %v296 = vcvt.s32.f32 %v285
    %v297 = vcvt.s32.f32 %v287
    %v298 = vcvt.s32.f32 %v289
    %v299 = vcvt.s32.f32 %v291
    %v300 = vrcp.pop %v292
    %v301 = vmul.f32 %v292, %v300
    %v302 = vsub.f32 1.0, %v301
    %v303 = vmul.f32 %v300, %v302
    %v304 = vadd.f32 %v300, %v303
    %vm305 = vweird.f32 %v292
    %vm306 = vweird.f32 %v300
    %vm307 = vmor %vm305, %vm306
    %v308 = vsel %vm307, %v300, %v304
    %v309 = vand.u32 2147483647, %v292
    %vm310 = vcmp.eq.f32.partialorder %v309, 8.507059e+37
    %v311 = vand.u32 %v292, 2147483648
    %v312 = vor.u32 1.1754944e-38, %v311
    %v313 = vsel %vm310, %v312, %v308
    %v314 = vmul.f32 1.0, %v313
    %v315 = vrcp.pop %v293
    %v316 = vmul.f32 %v293, %v315
    %v317 = vsub.f32 1.0, %v316
    %v318 = vmul.f32 %v315, %v317
    %v319 = vadd.f32 %v315, %v318
    %vm320 = vweird.f32 %v293
    %vm321 = vweird.f32 %v315
    %vm322 = vmor %vm320, %vm321
    %v323 = vsel %vm322, %v315, %v319
    %v324 = vand.u32 2147483647, %v293
    %vm325 = vcmp.eq.f32.partialorder %v324, 8.507059e+37
    %v326 = vand.u32 %v293, 2147483648
    %v327 = vor.u32 1.1754944e-38, %v326
    %v328 = vsel %vm325, %v327, %v323
    %v329 = vmul.f32 1.0, %v328
    %v330 = vrcp.pop %v294
    %v331 = vmul.f32 %v294, %v330
    %v332 = vsub.f32 1.0, %v331
    %v333 = vmul.f32 %v330, %v332
    %v334 = vadd.f32 %v330, %v333
    %vm335 = vweird.f32 %v294
    %vm336 = vweird.f32 %v330
    %vm337 = vmor %vm335, %vm336
    %v338 = vsel %vm337, %v330, %v334
    %v339 = vand.u32 2147483647, %v294
    %vm340 = vcmp.eq.f32.partialorder %v339, 8.507059e+37
    %v341 = vand.u32 %v294, 2147483648
    %v342 = vor.u32 1.1754944e-38, %v341
    %v343 = vsel %vm340, %v342, %v338
    %v344 = vmul.f32 1.0, %v343
    %v345 = vrcp.pop %v295
    %v346 = vmul.f32 %v295, %v345
    %v347 = vsub.f32 1.0, %v346
    %v348 = vmul.f32 %v345, %v347
    %v349 = vadd.f32 %v345, %v348
    %vm350 = vweird.f32 %v295
    %vm351 = vweird.f32 %v345
    %vm352 = vmor %vm350, %vm351
    %v353 = vsel %vm352, %v345, %v349
    %v354 = vand.u32 2147483647, %v295
    %vm355 = vcmp.eq.f32.partialorder %v354, 8.507059e+37
    %v356 = vand.u32 %v295, 2147483648
    %v357 = vor.u32 1.1754944e-38, %v356
    %v358 = vsel %vm355, %v357, %v353
    %v359 = vmul.f32 1.0, %v358
    %v360 = vrcp.pop %v296
    %v361 = vmul.f32 %v296, %v360
    %v362 = vsub.f32 1.0, %v361
    %v363 = vmul.f32 %v360, %v362
    %v364 = vadd.f32 %v360, %v363
    %vm365 = vweird.f32 %v296
    %vm366 = vweird.f32 %v360
    %vm367 = vmor %vm365, %vm366
    %v368 = vsel %vm367, %v360, %v364
    %v369 = vand.u32 2147483647, %v296
    %vm370 = vcmp.eq.f32.partialorder %v369, 8.507059e+37
    %v371 = vand.u32 %v296, 2147483648
    %v372 = vor.u32 1.1754944e-38, %v371
    %v373 = vsel %vm370, %v372, %v368
    %v374 = vmul.f32 1.0, %v373
    %v375 = vrcp.pop %v297
    %v376 = vmul.f32 %v297, %v375
    %v377 = vsub.f32 1.0, %v376
    %v378 = vmul.f32 %v375, %v377
    %v379 = vadd.f32 %v375, %v378
    %vm380 = vweird.f32 %v297
    %vm381 = vweird.f32 %v375
    %vm382 = vmor %vm380, %vm381
    %v383 = vsel %vm382, %v375, %v379
    %v384 = vand.u32 2147483647, %v297
    %vm385 = vcmp.eq.f32.partialorder %v384, 8.507059e+37
    %v386 = vand.u32 %v297, 2147483648
    %v387 = vor.u32 1.1754944e-38, %v386
    %v388 = vsel %vm385, %v387, %v383
    %v389 = vmul.f32 1.0, %v388
    %v390 = vrcp.pop %v298
    %v391 = vmul.f32 %v298, %v390
    %v392 = vsub.f32 1.0, %v391
    %v393 = vmul.f32 %v390, %v392
    %v394 = vadd.f32 %v390, %v393
    %vm395 = vweird.f32 %v298
    %vm396 = vweird.f32 %v390
    %vm397 = vmor %vm395, %vm396
    %v398 = vsel %vm397, %v390, %v394
    %v399 = vand.u32 2147483647, %v298
    %vm400 = vcmp.eq.f32.partialorder %v399, 8.507059e+37
    %v401 = vand.u32 %v298, 2147483648
    %v402 = vor.u32 1.1754944e-38, %v401
    %v403 = vsel %vm400, %v402, %v398
    %v404 = vmul.f32 1.0, %v403
    %v405 = vrcp.pop %v299
    %v406 = vmul.f32 %v299, %v405
    %v407 = vsub.f32 1.0, %v406
    %v408 = vmul.f32 %v405, %v407
    %v409 = vadd.f32 %v405, %v408
    %vm410 = vweird.f32 %v299
    %vm411 = vweird.f32 %v405
    %vm412 = vmor %vm410, %vm411
    %v413 = vsel %vm412, %v405, %v409
    %v414 = vand.u32 2147483647, %v299
    %vm415 = vcmp.eq.f32.partialorder %v414, 8.507059e+37
    %v416 = vand.u32 %v299, 2147483648
    %v417 = vor.u32 1.1754944e-38, %v416
    %v418 = vsel %vm415, %v417, %v413
    %v419 = vmul.f32 1.0, %v418
    %v420 = vlaneseq
    %v421 = vshrl.u32 %v420, 7
    %v422 = vadd.s32 %v421, 8
    %v423 = vperm.slane %v77, 0
    %v424 = vperm.slane %v79, 0
    %v425 = vperm.slane %v81, 0
    %v426 = vperm.slane %v83, 0
    %v427 = vperm.slane %v85, 0
    %v428 = vperm.slane %v87, 0
    %v429 = vperm.slane %v89, 0
    %v430 = vperm.slane %v91, 0
    %vm431 = vcmp.lt.s32.totalorder %v421, %v423
    %vm432 = vcmp.lt.s32.totalorder %v422, %v423
    %vm433 = vcmp.lt.s32.totalorder %v421, %v424
    %vm434 = vcmp.lt.s32.totalorder %v422, %v424
    %vm435 = vcmp.lt.s32.totalorder %v421, %v425
    %vm436 = vcmp.lt.s32.totalorder %v422, %v425
    %vm437 = vcmp.lt.s32.totalorder %v421, %v426
    %vm438 = vcmp.lt.s32.totalorder %v422, %v426
    %vm439 = vcmp.lt.s32.totalorder %v421, %v427
    %vm440 = vcmp.lt.s32.totalorder %v422, %v427
    %vm441 = vcmp.lt.s32.totalorder %v421, %v428
    %vm442 = vcmp.lt.s32.totalorder %v422, %v428
    %vm443 = vcmp.lt.s32.totalorder %v421, %v429
    %vm444 = vcmp.lt.s32.totalorder %v422, %v429
    %vm445 = vcmp.lt.s32.totalorder %v421, %v430
    %vm446 = vcmp.lt.s32.totalorder %v422, %v430
    %v447 = vsel %vm431, 1, 0
    %v448 = vsel %vm432, 1, 0
    %v449 = vsel %vm433, 1, 0
    %v450 = vsel %vm434, 1, 0
    %v451 = vsel %vm435, 1, 0
    %v452 = vsel %vm436, 1, 0
    %v453 = vsel %vm437, 1, 0
    %v454 = vsel %vm438, 1, 0
    %v455 = vsel %vm439, 1, 0
    %v456 = vsel %vm440, 1, 0
    %v457 = vsel %vm441, 1, 0
    %v458 = vsel %vm442, 1, 0
    %v459 = vsel %vm443, 1, 0
    %v460 = vsel %vm444, 1, 0
    %v461 = vsel %vm445, 1, 0
    %v462 = vsel %vm446, 1, 0
    %v463 = vcvt.s32.f32 %v447
    %v464 = vcvt.s32.f32 %v448
    %v465 = vcvt.s32.f32 %v449
    %v466 = vcvt.s32.f32 %v450
    %v467 = vcvt.s32.f32 %v451
    %v468 = vcvt.s32.f32 %v452
    %v469 = vcvt.s32.f32 %v453
    %v470 = vcvt.s32.f32 %v454
    %v471 = vcvt.s32.f32 %v455
    %v472 = vcvt.s32.f32 %v456
    %v473 = vcvt.s32.f32 %v457
    %v474 = vcvt.s32.f32 %v458
    %v475 = vcvt.s32.f32 %v459
    %v476 = vcvt.s32.f32 %v460
    %v477 = vcvt.s32.f32 %v461
    %v478 = vcvt.s32.f32 %v462
    %vm479 = vcmp.ge.s32.totalorder %v421, %v423
    %vm480 = vcmp.ge.s32.totalorder %v422, %v423
    %vm481 = vcmp.ge.s32.totalorder %v421, %v424
    %vm482 = vcmp.ge.s32.totalorder %v422, %v424
    %vm483 = vcmp.ge.s32.totalorder %v421, %v425
    %vm484 = vcmp.ge.s32.totalorder %v422, %v425
    %vm485 = vcmp.ge.s32.totalorder %v421, %v426
    %vm486 = vcmp.ge.s32.totalorder %v422, %v426
    %vm487 = vcmp.ge.s32.totalorder %v421, %v427
    %vm488 = vcmp.ge.s32.totalorder %v422, %v427
    %vm489 = vcmp.ge.s32.totalorder %v421, %v428
    %vm490 = vcmp.ge.s32.totalorder %v422, %v428
    %vm491 = vcmp.ge.s32.totalorder %v421, %v429
    %vm492 = vcmp.ge.s32.totalorder %v422, %v429
    %vm493 = vcmp.ge.s32.totalorder %v421, %v430
    %vm494 = vcmp.ge.s32.totalorder %v422, %v430
    %v495 = vperm.slane %v109, 0
    %v496 = vperm.slane %v111, 0
    %v497 = vperm.slane %v113, 0
    %v498 = vperm.slane %v115, 0
    %v499 = vperm.slane %v117, 0
    %v500 = vperm.slane %v119, 0
    %v501 = vperm.slane %v121, 0
    %v502 = vperm.slane %v123, 0
    %vm503 = vcmp.lt.s32.totalorder %v421, %v495
    %vm504 = vcmp.lt.s32.totalorder %v422, %v495
    %vm505 = vcmp.lt.s32.totalorder %v421, %v496
    %vm506 = vcmp.lt.s32.totalorder %v422, %v496
    %vm507 = vcmp.lt.s32.totalorder %v421, %v497
    %vm508 = vcmp.lt.s32.totalorder %v422, %v497
    %vm509 = vcmp.lt.s32.totalorder %v421, %v498
    %vm510 = vcmp.lt.s32.totalorder %v422, %v498
    %vm511 = vcmp.lt.s32.totalorder %v421, %v499
    %vm512 = vcmp.lt.s32.totalorder %v422, %v499
    %vm513 = vcmp.lt.s32.totalorder %v421, %v500
    %vm514 = vcmp.lt.s32.totalorder %v422, %v500
    %vm515 = vcmp.lt.s32.totalorder %v421, %v501
    %vm516 = vcmp.lt.s32.totalorder %v422, %v501
    %vm517 = vcmp.lt.s32.totalorder %v421, %v502
    %vm518 = vcmp.lt.s32.totalorder %v422, %v502
    %vm519 = vmand %vm479, %vm503
    %vm520 = vmand %vm480, %vm504
    %vm521 = vmand %vm481, %vm505
    %vm522 = vmand %vm482, %vm506
    %vm523 = vmand %vm483, %vm507
    %vm524 = vmand %vm484, %vm508
    %vm525 = vmand %vm485, %vm509
    %vm526 = vmand %vm486, %vm510
    %vm527 = vmand %vm487, %vm511
    %vm528 = vmand %vm488, %vm512
    %vm529 = vmand %vm489, %vm513
    %vm530 = vmand %vm490, %vm514
    %vm531 = vmand %vm491, %vm515
    %vm532 = vmand %vm492, %vm516
    %vm533 = vmand %vm493, %vm517
    %vm534 = vmand %vm494, %vm518
    %v535 = vsel %vm519, 1, 0
    %v536 = vsel %vm520, 1, 0
    %v537 = vsel %vm521, 1, 0
    %v538 = vsel %vm522, 1, 0
    %v539 = vsel %vm523, 1, 0
    %v540 = vsel %vm524, 1, 0
    %v541 = vsel %vm525, 1, 0
    %v542 = vsel %vm526, 1, 0
    %v543 = vsel %vm527, 1, 0
    %v544 = vsel %vm528, 1, 0
    %v545 = vsel %vm529, 1, 0
    %v546 = vsel %vm530, 1, 0
    %v547 = vsel %vm531, 1, 0
    %v548 = vsel %vm532, 1, 0
    %v549 = vsel %vm533, 1, 0
    %v550 = vsel %vm534, 1, 0
    %v551 = vcvt.s32.f32 %v535
    %v552 = vcvt.s32.f32 %v536
    %v553 = vcvt.s32.f32 %v537
    %v554 = vcvt.s32.f32 %v538
    %v555 = vcvt.s32.f32 %v539
    %v556 = vcvt.s32.f32 %v540
    %v557 = vcvt.s32.f32 %v541
    %v558 = vcvt.s32.f32 %v542
    %v559 = vcvt.s32.f32 %v543
    %v560 = vcvt.s32.f32 %v544
    %v561 = vcvt.s32.f32 %v545
    %v562 = vcvt.s32.f32 %v546
    %v563 = vcvt.s32.f32 %v547
    %v564 = vcvt.s32.f32 %v548
    %v565 = vcvt.s32.f32 %v549
    %v566 = vcvt.s32.f32 %v550
    %v567 = vperm.slane %v162, 0
    %v568 = vperm.slane %v177, 0
    %v569 = vperm.slane %v192, 0
    %v570 = vperm.slane %v207, 0
    %v571 = vperm.slane %v222, 0
    %v572 = vperm.slane %v237, 0
    %v573 = vperm.slane %v252, 0
    %v574 = vperm.slane %v267, 0
    %v575 = vmul.f32 %v567, %v463
    %v576 = vmul.f32 %v567, %v464
    %v577 = vmul.f32 %v568, %v465
    %v578 = vmul.f32 %v568, %v466
    %v579 = vmul.f32 %v569, %v467
    %v580 = vmul.f32 %v569, %v468
    %v581 = vmul.f32 %v570, %v469
    %v582 = vmul.f32 %v570, %v470
    %v583 = vmul.f32 %v571, %v471
    %v584 = vmul.f32 %v571, %v472
    %v585 = vmul.f32 %v572, %v473
    %v586 = vmul.f32 %v572, %v474
    %v587 = vmul.f32 %v573, %v475
    %v588 = vmul.f32 %v573, %v476
    %v589 = vmul.f32 %v574, %v477
    %v590 = vmul.f32 %v574, %v478
    %v591 = vperm.slane %v314, 0
    %v592 = vperm.slane %v329, 0
    %v593 = vperm.slane %v344, 0
    %v594 = vperm.slane %v359, 0
    %v595 = vperm.slane %v374, 0
    %v596 = vperm.slane %v389, 0
    %v597 = vperm.slane %v404, 0
    %v598 = vperm.slane %v419, 0
    %v599 = vmul.f32 %v591, %v551
    %v600 = vmul.f32 %v591, %v552
    %v601 = vmul.f32 %v592, %v553
    %v602 = vmul.f32 %v592, %v554
    %v603 = vmul.f32 %v593, %v555
    %v604 = vmul.f32 %v593, %v556
    %v605 = vmul.f32 %v594, %v557
    %v606 = vmul.f32 %v594, %v558
    %v607 = vmul.f32 %v595, %v559
    %v608 = vmul.f32 %v595, %v560
    %v609 = vmul.f32 %v596, %v561
    %v610 = vmul.f32 %v596, %v562
    %v611 = vmul.f32 %v597, %v563
    %v612 = vmul.f32 %v597, %v564
    %v613 = vmul.f32 %v598, %v565
    %v614 = vmul.f32 %v598, %v566
    %v615 = vadd.f32 %v575, %v599
    %v616 = vadd.f32 %v576, %v600
    %v617 = vadd.f32 %v577, %v601
    %v618 = vadd.f32 %v578, %v602
    %v619 = vadd.f32 %v579, %v603
    %v620 = vadd.f32 %v580, %v604
    %v621 = vadd.f32 %v581, %v605
    %v622 = vadd.f32 %v582, %v606
    %v623 = vadd.f32 %v583, %v607
    %v624 = vadd.f32 %v584, %v608
    %v625 = vadd.f32 %v585, %v609
    %v626 = vadd.f32 %v586, %v610
    %v627 = vadd.f32 %v587, %v611
    %v628 = vadd.f32 %v588, %v612
    %v629 = vadd.f32 %v589, %v613
    %v630 = vadd.f32 %v590, %v614
    %v631 = vmul.f32 %v615, 0.5
    %v632 = vmul.f32 %v616, 0.5
    %v633 = vmul.f32 %v617, 0.5
    %v634 = vmul.f32 %v618, 0.5
    %v635 = vmul.f32 %v619, 0.5
    %v636 = vmul.f32 %v620, 0.5
    %v637 = vmul.f32 %v621, 0.5
    %v638 = vmul.f32 %v622, 0.5
    %v639 = vmul.f32 %v623, 0.5
    %v640 = vmul.f32 %v624, 0.5
    %v641 = vmul.f32 %v625, 0.5
    %v642 = vmul.f32 %v626, 0.5
    %v643 = vmul.f32 %v627, 0.5
    %v644 = vmul.f32 %v628, 0.5
    %v645 = vmul.f32 %v629, 0.5
    %v646 = vmul.f32 %v630, 0.5
    %v647 = vld [vmem:[%s4] sm:$0x3]
    %v648 = vld [vmem:[%s1] sm:$0xf]
    %v649 = vld [vmem:[%s1 + $0x4] sm:$0xf]
    %v650 = vld [vmem:[%s1 + $0x8] sm:$0xf]
    %v651 = vld [vmem:[%s1 + $0xc] sm:$0xf]
    %v652 = vld [vmem:[%s1 + $0x10] sm:$0xf]
    %v653 = vld [vmem:[%s1 + $0x14] sm:$0xf]
    %v654 = vld [vmem:[%s1 + $0x18] sm:$0xf]
    %v655 = vld [vmem:[%s1 + $0x1c] sm:$0xf]
    %v656 = vld [vmem:[%s1 + $0x20] sm:$0xf]
    %v657 = vld [vmem:[%s1 + $0x24] sm:$0xf]
    %v658 = vld [vmem:[%s1 + $0x28] sm:$0xf]
    %v659 = vld [vmem:[%s1 + $0x2c] sm:$0xf]
    %v660 = vld [vmem:[%s1 + $0x30] sm:$0xf]
    %v661 = vld [vmem:[%s1 + $0x34] sm:$0xf]
    %v662 = vld [vmem:[%s1 + $0x38] sm:$0xf]
    %v663 = vld [vmem:[%s1 + $0x3c] sm:$0xf]
    %v664 = vunpack.c.l.bf16 %v648
    %v665 = vunpack.c.l.bf16 %v649
    %v666 = vunpack.c.l.bf16 %v650
    %v667 = vunpack.c.l.bf16 %v651
    %v668 = vunpack.c.l.bf16 %v652
    %v669 = vunpack.c.l.bf16 %v653
    %v670 = vunpack.c.l.bf16 %v654
    %v671 = vunpack.c.l.bf16 %v655
    %v672 = vunpack.c.l.bf16 %v656
    %v673 = vunpack.c.l.bf16 %v657
    %v674 = vunpack.c.l.bf16 %v658
    %v675 = vunpack.c.l.bf16 %v659
    %v676 = vunpack.c.l.bf16 %v660
    %v677 = vunpack.c.l.bf16 %v661
    %v678 = vunpack.c.l.bf16 %v662
    %v679 = vunpack.c.l.bf16 %v663
    %681 = vset.pattern.permute.xlu0 0
    %682 = vperm.xlu0 %681, %v631
    %v683 = vpop.permute.xlu0 %682
    %686 = vset.pattern.permute.xlu0 0
    %687 = vperm.xlu0 %686, %v632
    %v688 = vpop.permute.xlu0 %687
    %691 = vset.pattern.permute.xlu0 0
    %692 = vperm.xlu0 %691, %v633
    %v693 = vpop.permute.xlu0 %692
    %696 = vset.pattern.permute.xlu0 0
    %697 = vperm.xlu0 %696, %v634
    %v698 = vpop.permute.xlu0 %697
    %701 = vset.pattern.permute.xlu0 0
    %702 = vperm.xlu0 %701, %v635
    %v703 = vpop.permute.xlu0 %702
    %706 = vset.pattern.permute.xlu0 0
    %707 = vperm.xlu0 %706, %v636
    %v708 = vpop.permute.xlu0 %707
    %711 = vset.pattern.permute.xlu0 0
    %712 = vperm.xlu0 %711, %v637
    %v713 = vpop.permute.xlu0 %712
    %716 = vset.pattern.permute.xlu0 0
    %717 = vperm.xlu0 %716, %v638
    %v718 = vpop.permute.xlu0 %717
    %721 = vset.pattern.permute.xlu0 0
    %722 = vperm.xlu0 %721, %v639
    %v723 = vpop.permute.xlu0 %722
    %726 = vset.pattern.permute.xlu0 0
    %727 = vperm.xlu0 %726, %v640
    %v728 = vpop.permute.xlu0 %727
    %731 = vset.pattern.permute.xlu0 0
    %732 = vperm.xlu0 %731, %v641
    %v733 = vpop.permute.xlu0 %732
    %736 = vset.pattern.permute.xlu0 0
    %737 = vperm.xlu0 %736, %v642
    %v738 = vpop.permute.xlu0 %737
    %741 = vset.pattern.permute.xlu0 0
    %742 = vperm.xlu0 %741, %v643
    %v743 = vpop.permute.xlu0 %742
    %746 = vset.pattern.permute.xlu0 0
    %747 = vperm.xlu0 %746, %v644
    %v748 = vpop.permute.xlu0 %747
    %751 = vset.pattern.permute.xlu0 0
    %752 = vperm.xlu0 %751, %v645
    %v753 = vpop.permute.xlu0 %752
    %756 = vset.pattern.permute.xlu0 0
    %757 = vperm.xlu0 %756, %v646
    %v758 = vpop.permute.xlu0 %757
    %v760 = vmul.f32 %v664, %v683
    %v761 = vmul.f32 %v665, %v688
    %v762 = vmul.f32 %v666, %v693
    %v763 = vmul.f32 %v667, %v698
    %v764 = vmul.f32 %v668, %v703
    %v765 = vmul.f32 %v669, %v708
    %v766 = vmul.f32 %v670, %v713
    %v767 = vmul.f32 %v671, %v718
    %v768 = vmul.f32 %v672, %v723
    %v769 = vmul.f32 %v673, %v728
    %v770 = vmul.f32 %v674, %v733
    %v771 = vmul.f32 %v675, %v738
    %v772 = vmul.f32 %v676, %v743
    %v773 = vmul.f32 %v677, %v748
    %v774 = vmul.f32 %v678, %v753
    %v775 = vmul.f32 %v679, %v758
    %v776 = vadd.f32 %v760, %v761
    %v777 = vrot.slane %v776, 4
    %v778 = vadd.f32 %v776, %v777
    %v779 = vrot.slane %v778, 2
    %v780 = vadd.f32 %v778, %v779
    %v781 = vrot.slane %v780, 1
    %v782 = vadd.f32 %v780, %v781
    %v783 = vadd.f32 %v762, %v763
    %v784 = vrot.slane %v783, 4
    %v785 = vadd.f32 %v783, %v784
    %v786 = vrot.slane %v785, 2
    %v787 = vadd.f32 %v785, %v786
    %v788 = vrot.slane %v787, 1
    %v789 = vadd.f32 %v787, %v788
    %v790 = vadd.f32 %v764, %v765
    %v791 = vrot.slane %v790, 4
    %v792 = vadd.f32 %v790, %v791
    %v793 = vrot.slane %v792, 2
    %v794 = vadd.f32 %v792, %v793
    %v795 = vrot.slane %v794, 1
    %v796 = vadd.f32 %v794, %v795
    %v797 = vadd.f32 %v766, %v767
    %v798 = vrot.slane %v797, 4
    %v799 = vadd.f32 %v797, %v798
    %v800 = vrot.slane %v799, 2
    %v801 = vadd.f32 %v799, %v800
    %v802 = vrot.slane %v801, 1
    %v803 = vadd.f32 %v801, %v802
    %v804 = vadd.f32 %v768, %v769
    %v805 = vrot.slane %v804, 4
    %v806 = vadd.f32 %v804, %v805
    %v807 = vrot.slane %v806, 2
    %v808 = vadd.f32 %v806, %v807
    %v809 = vrot.slane %v808, 1
    %v810 = vadd.f32 %v808, %v809
    %v811 = vadd.f32 %v770, %v771
    %v812 = vrot.slane %v811, 4
    %v813 = vadd.f32 %v811, %v812
    %v814 = vrot.slane %v813, 2
    %v815 = vadd.f32 %v813, %v814
    %v816 = vrot.slane %v815, 1
    %v817 = vadd.f32 %v815, %v816
    %v818 = vadd.f32 %v772, %v773
    %v819 = vrot.slane %v818, 4
    %v820 = vadd.f32 %v818, %v819
    %v821 = vrot.slane %v820, 2
    %v822 = vadd.f32 %v820, %v821
    %v823 = vrot.slane %v822, 1
    %v824 = vadd.f32 %v822, %v823
    %v825 = vadd.f32 %v774, %v775
    %v826 = vrot.slane %v825, 4
    %v827 = vadd.f32 %v825, %v826
    %v828 = vrot.slane %v827, 2
    %v829 = vadd.f32 %v827, %v828
    %v830 = vrot.slane %v829, 1
    %v831 = vadd.f32 %v829, %v830
    %v832 = vmul.f32 %v782, %v647
    %v833 = vmul.f32 %v789, %v647
    %v834 = vmul.f32 %v796, %v647
    %v835 = vmul.f32 %v803, %v647
    %v836 = vmul.f32 %v810, %v647
    %v837 = vmul.f32 %v817, %v647
    %v838 = vmul.f32 %v824, %v647
    %v839 = vmul.f32 %v831, %v647
    %vm840 = vcmask 1040384
    %v841 = vsel %vm840, %v832, 0.0
    %842 = vadd.xlane.f32.xlu0 %v841
    %v843 = vpop.xlane.xlu0 %842
    %v844 = vsel %vm840, %v833, 0.0
    %845 = vadd.xlane.f32.xlu0 %v844
    %v846 = vpop.xlane.xlu0 %845
    %v847 = vsel %vm840, %v834, 0.0
    %848 = vadd.xlane.f32.xlu0 %v847
    %v849 = vpop.xlane.xlu0 %848
    %v850 = vsel %vm840, %v835, 0.0
    %851 = vadd.xlane.f32.xlu0 %v850
    %v852 = vpop.xlane.xlu0 %851
    %v853 = vsel %vm840, %v836, 0.0
    %854 = vadd.xlane.f32.xlu0 %v853
    %v855 = vpop.xlane.xlu0 %854
    %v856 = vsel %vm840, %v837, 0.0
    %857 = vadd.xlane.f32.xlu0 %v856
    %v858 = vpop.xlane.xlu0 %857
    %v859 = vsel %vm840, %v838, 0.0
    %860 = vadd.xlane.f32.xlu0 %v859
    %v861 = vpop.xlane.xlu0 %860
    %v862 = vsel %vm840, %v839, 0.0
    %863 = vadd.xlane.f32.xlu0 %v862
    %v864 = vpop.xlane.xlu0 %863
    %v866 = vrot.slane %v647, 1
    %v868 = vadd.f32 %v843, %v866
    %v869 = vadd.f32 %v846, %v866
    %v870 = vadd.f32 %v849, %v866
    %v871 = vadd.f32 %v852, %v866
    %v872 = vadd.f32 %v855, %v866
    %v873 = vadd.f32 %v858, %v866
    %v874 = vadd.f32 %v861, %v866
    %v875 = vadd.f32 %v864, %v866
    %v876 = vld [vmem:[#allocation2] sm:$0xf]
    %v877 = vld [vmem:[#allocation2 + $0x4] sm:$0xf]
    %v878 = vld [vmem:[#allocation2 + $0x8] sm:$0xf]
    %v879 = vld [vmem:[#allocation2 + $0xc] sm:$0xf]
    %v880 = vld [vmem:[#allocation2 + $0x10] sm:$0xf]
    %v881 = vld [vmem:[#allocation2 + $0x14] sm:$0xf]
    %v882 = vld [vmem:[#allocation2 + $0x18] sm:$0xf]
    %v883 = vld [vmem:[#allocation2 + $0x1c] sm:$0xf]
    %v884 = vld [vmem:[#allocation2 + $0x20] sm:$0xf]
    %v885 = vld [vmem:[#allocation2 + $0x24] sm:$0xf]
    %v886 = vld [vmem:[#allocation2 + $0x28] sm:$0xf]
    %v887 = vld [vmem:[#allocation2 + $0x2c] sm:$0xf]
    %v888 = vld [vmem:[#allocation2 + $0x30] sm:$0xf]
    %v889 = vld [vmem:[#allocation2 + $0x34] sm:$0xf]
    %v890 = vld [vmem:[#allocation2 + $0x38] sm:$0xf]
    %v891 = vld [vmem:[#allocation2 + $0x3c] sm:$0xf]
    %v892 = vunpack.c.l.bf16 %v876
    %v893 = vunpack.c.l.bf16 %v877
    %v894 = vunpack.c.l.bf16 %v878
    %v895 = vunpack.c.l.bf16 %v879
    %v896 = vunpack.c.l.bf16 %v880
    %v897 = vunpack.c.l.bf16 %v881
    %v898 = vunpack.c.l.bf16 %v882
    %v899 = vunpack.c.l.bf16 %v883
    %v900 = vunpack.c.l.bf16 %v884
    %v901 = vunpack.c.l.bf16 %v885
    %v902 = vunpack.c.l.bf16 %v886
    %v903 = vunpack.c.l.bf16 %v887
    %v904 = vunpack.c.l.bf16 %v888
    %v905 = vunpack.c.l.bf16 %v889
    %v906 = vunpack.c.l.bf16 %v890
    %v907 = vunpack.c.l.bf16 %v891
    %v908 = vmul.f32 %v892, %v683
    %v909 = vmul.f32 %v893, %v688
    %v910 = vmul.f32 %v894, %v693
    %v911 = vmul.f32 %v895, %v698
    %v912 = vmul.f32 %v896, %v703
    %v913 = vmul.f32 %v897, %v708
    %v914 = vmul.f32 %v898, %v713
    %v915 = vmul.f32 %v899, %v718
    %v916 = vmul.f32 %v900, %v723
    %v917 = vmul.f32 %v901, %v728
    %v918 = vmul.f32 %v902, %v733
    %v919 = vmul.f32 %v903, %v738
    %v920 = vmul.f32 %v904, %v743
    %v921 = vmul.f32 %v905, %v748
    %v922 = vmul.f32 %v906, %v753
    %v923 = vmul.f32 %v907, %v758
    %v924 = vadd.f32 %v908, %v909
    %v925 = vrot.slane %v924, 4
    %v926 = vadd.f32 %v924, %v925
    %v927 = vrot.slane %v926, 2
    %v928 = vadd.f32 %v926, %v927
    %v929 = vrot.slane %v928, 1
    %v930 = vadd.f32 %v928, %v929
    %v931 = vadd.f32 %v910, %v911
    %v932 = vrot.slane %v931, 4
    %v933 = vadd.f32 %v931, %v932
    %v934 = vrot.slane %v933, 2
    %v935 = vadd.f32 %v933, %v934
    %v936 = vrot.slane %v935, 1
    %v937 = vadd.f32 %v935, %v936
    %v938 = vadd.f32 %v912, %v913
    %v939 = vrot.slane %v938, 4
    %v940 = vadd.f32 %v938, %v939
    %v941 = vrot.slane %v940, 2
    %v942 = vadd.f32 %v940, %v941
    %v943 = vrot.slane %v942, 1
    %v944 = vadd.f32 %v942, %v943
    %v945 = vadd.f32 %v914, %v915
    %v946 = vrot.slane %v945, 4
    %v947 = vadd.f32 %v945, %v946
    %v948 = vrot.slane %v947, 2
    %v949 = vadd.f32 %v947, %v948
    %v950 = vrot.slane %v949, 1
    %v951 = vadd.f32 %v949, %v950
    %v952 = vadd.f32 %v916, %v917
    %v953 = vrot.slane %v952, 4
    %v954 = vadd.f32 %v952, %v953
    %v955 = vrot.slane %v954, 2
    %v956 = vadd.f32 %v954, %v955
    %v957 = vrot.slane %v956, 1
    %v958 = vadd.f32 %v956, %v957
    %v959 = vadd.f32 %v918, %v919
    %v960 = vrot.slane %v959, 4
    %v961 = vadd.f32 %v959, %v960
    %v962 = vrot.slane %v961, 2
    %v963 = vadd.f32 %v961, %v962
    %v964 = vrot.slane %v963, 1
    %v965 = vadd.f32 %v963, %v964
    %v966 = vadd.f32 %v920, %v921
    %v967 = vrot.slane %v966, 4
    %v968 = vadd.f32 %v966, %v967
    %v969 = vrot.slane %v968, 2
    %v970 = vadd.f32 %v968, %v969
    %v971 = vrot.slane %v970, 1
    %v972 = vadd.f32 %v970, %v971
    %v973 = vadd.f32 %v922, %v923
    %v974 = vrot.slane %v973, 4
    %v975 = vadd.f32 %v973, %v974
    %v976 = vrot.slane %v975, 2
    %v977 = vadd.f32 %v975, %v976
    %v978 = vrot.slane %v977, 1
    %v979 = vadd.f32 %v977, %v978
    %v980 = vmul.f32 %v930, %v647
    %v981 = vmul.f32 %v937, %v647
    %v982 = vmul.f32 %v944, %v647
    %v983 = vmul.f32 %v951, %v647
    %v984 = vmul.f32 %v958, %v647
    %v985 = vmul.f32 %v965, %v647
    %v986 = vmul.f32 %v972, %v647
    %v987 = vmul.f32 %v979, %v647
    %v988 = vsel %vm840, %v980, 0.0
    %989 = vadd.xlane.f32.xlu0 %v988
    %v990 = vpop.xlane.xlu0 %989
    %v991 = vsel %vm840, %v981, 0.0
    %992 = vadd.xlane.f32.xlu0 %v991
    %v993 = vpop.xlane.xlu0 %992
    %v994 = vsel %vm840, %v982, 0.0
    %995 = vadd.xlane.f32.xlu0 %v994
    %v996 = vpop.xlane.xlu0 %995
    %v997 = vsel %vm840, %v983, 0.0
    %998 = vadd.xlane.f32.xlu0 %v997
    %v999 = vpop.xlane.xlu0 %998
    %v1000 = vsel %vm840, %v984, 0.0
    %1001 = vadd.xlane.f32.xlu0 %v1000
    %v1002 = vpop.xlane.xlu0 %1001
    %v1003 = vsel %vm840, %v985, 0.0
    %1004 = vadd.xlane.f32.xlu0 %v1003
    %v1005 = vpop.xlane.xlu0 %1004
    %v1006 = vsel %vm840, %v986, 0.0
    %1007 = vadd.xlane.f32.xlu0 %v1006
    %v1008 = vpop.xlane.xlu0 %1007
    %v1009 = vsel %vm840, %v987, 0.0
    %1010 = vadd.xlane.f32.xlu0 %v1009
    %v1011 = vpop.xlane.xlu0 %1010
    %v1012 = vadd.f32 %v990, %v866
    %v1013 = vadd.f32 %v993, %v866
    %v1014 = vadd.f32 %v996, %v866
    %v1015 = vadd.f32 %v999, %v866
    %v1016 = vadd.f32 %v1002, %v866
    %v1017 = vadd.f32 %v1005, %v866
    %v1018 = vadd.f32 %v1008, %v866
    %v1019 = vadd.f32 %v1011, %v866
    %v1020 = vld [vmem:[#allocation4] sm:$0xf]
    %v1021 = vld [vmem:[#allocation4 + $0x4] sm:$0xf]
    %v1022 = vld [vmem:[#allocation4 + $0x8] sm:$0xf]
    %v1023 = vld [vmem:[#allocation4 + $0xc] sm:$0xf]
    %v1024 = vld [vmem:[#allocation4 + $0x10] sm:$0xf]
    %v1025 = vld [vmem:[#allocation4 + $0x14] sm:$0xf]
    %v1026 = vld [vmem:[#allocation4 + $0x18] sm:$0xf]
    %v1027 = vld [vmem:[#allocation4 + $0x1c] sm:$0xf]
    %v1028 = vunpack.c.l.bf16 %v1020
    %v1029 = vunpack.c.l.bf16 %v1021
    %v1030 = vunpack.c.l.bf16 %v1022
    %v1031 = vunpack.c.l.bf16 %v1023
    %v1032 = vunpack.c.l.bf16 %v1024
    %v1033 = vunpack.c.l.bf16 %v1025
    %v1034 = vunpack.c.l.bf16 %v1026
    %v1035 = vunpack.c.l.bf16 %v1027
    %v1036 = vperm.slane %v52, 2
    %v1037 = vperm.slane %v53, 2
    %v1038 = vperm.slane %v54, 2
    %v1039 = vperm.slane %v55, 2
    %v1040 = vperm.slane %v56, 2
    %v1041 = vperm.slane %v57, 2
    %v1042 = vperm.slane %v58, 2
    %v1043 = vperm.slane %v59, 2
    %vm1044 = vcmp.lt.s32.totalorder %v421, %v1036
    %vm1045 = vcmp.lt.s32.totalorder %v421, %v1037
    %vm1046 = vcmp.lt.s32.totalorder %v421, %v1038
    %vm1047 = vcmp.lt.s32.totalorder %v421, %v1039
    %vm1048 = vcmp.lt.s32.totalorder %v421, %v1040
    %vm1049 = vcmp.lt.s32.totalorder %v421, %v1041
    %vm1050 = vcmp.lt.s32.totalorder %v421, %v1042
    %vm1051 = vcmp.lt.s32.totalorder %v421, %v1043
    %v1052 = vsel %vm1044, 1, 0
    %v1053 = vsel %vm1045, 1, 0
    %v1054 = vsel %vm1046, 1, 0
    %v1055 = vsel %vm1047, 1, 0
    %v1056 = vsel %vm1048, 1, 0
    %v1057 = vsel %vm1049, 1, 0
    %v1058 = vsel %vm1050, 1, 0
    %v1059 = vsel %vm1051, 1, 0
    %v1060 = vcvt.s32.f32 %v1052
    %v1061 = vcvt.s32.f32 %v1053
    %v1062 = vcvt.s32.f32 %v1054
    %v1063 = vcvt.s32.f32 %v1055
    %v1064 = vcvt.s32.f32 %v1056
    %v1065 = vcvt.s32.f32 %v1057
    %v1066 = vcvt.s32.f32 %v1058
    %v1067 = vcvt.s32.f32 %v1059
    %vm1068 = vcmp.gt.s32.totalorder %v52, 1
    %v1069 = vsel %vm1068, %v52, 1
    %vm1070 = vcmp.gt.s32.totalorder %v53, 1
    %v1071 = vsel %vm1070, %v53, 1
    %vm1072 = vcmp.gt.s32.totalorder %v54, 1
    %v1073 = vsel %vm1072, %v54, 1
    %vm1074 = vcmp.gt.s32.totalorder %v55, 1
    %v1075 = vsel %vm1074, %v55, 1
    %vm1076 = vcmp.gt.s32.totalorder %v56, 1
    %v1077 = vsel %vm1076, %v56, 1
    %vm1078 = vcmp.gt.s32.totalorder %v57, 1
    %v1079 = vsel %vm1078, %v57, 1
    %vm1080 = vcmp.gt.s32.totalorder %v58, 1
    %v1081 = vsel %vm1080, %v58, 1
    %vm1082 = vcmp.gt.s32.totalorder %v59, 1
    %v1083 = vsel %vm1082, %v59, 1
    %v1084 = vcvt.s32.f32 %v1069
    %v1085 = vcvt.s32.f32 %v1071
    %v1086 = vcvt.s32.f32 %v1073
    %v1087 = vcvt.s32.f32 %v1075
    %v1088 = vcvt.s32.f32 %v1077
    %v1089 = vcvt.s32.f32 %v1079
    %v1090 = vcvt.s32.f32 %v1081
    %v1091 = vcvt.s32.f32 %v1083
    %v1092 = vrcp.pop %v1084
    %v1093 = vmul.f32 %v1084, %v1092
    %v1094 = vsub.f32 1.0, %v1093
    %v1095 = vmul.f32 %v1092, %v1094
    %v1096 = vadd.f32 %v1092, %v1095
    %vm1097 = vweird.f32 %v1084
    %vm1098 = vweird.f32 %v1092
    %vm1099 = vmor %vm1097, %vm1098
    %v1100 = vsel %vm1099, %v1092, %v1096
    %v1101 = vand.u32 2147483647, %v1084
    %vm1102 = vcmp.eq.f32.partialorder %v1101, 8.507059e+37
    %v1103 = vand.u32 %v1084, 2147483648
    %v1104 = vor.u32 1.1754944e-38, %v1103
    %v1105 = vsel %vm1102, %v1104, %v1100
    %v1106 = vmul.f32 1.0, %v1105
    %v1107 = vrcp.pop %v1085
    %v1108 = vmul.f32 %v1085, %v1107
    %v1109 = vsub.f32 1.0, %v1108
    %v1110 = vmul.f32 %v1107, %v1109
    %v1111 = vadd.f32 %v1107, %v1110
    %vm1112 = vweird.f32 %v1085
    %vm1113 = vweird.f32 %v1107
    %vm1114 = vmor %vm1112, %vm1113
    %v1115 = vsel %vm1114, %v1107, %v1111
    %v1116 = vand.u32 2147483647, %v1085
    %vm1117 = vcmp.eq.f32.partialorder %v1116, 8.507059e+37
    %v1118 = vand.u32 %v1085, 2147483648
    %v1119 = vor.u32 1.1754944e-38, %v1118
    %v1120 = vsel %vm1117, %v1119, %v1115
    %v1121 = vmul.f32 1.0, %v1120
    %v1122 = vrcp.pop %v1086
    %v1123 = vmul.f32 %v1086, %v1122
    %v1124 = vsub.f32 1.0, %v1123
    %v1125 = vmul.f32 %v1122, %v1124
    %v1126 = vadd.f32 %v1122, %v1125
    %vm1127 = vweird.f32 %v1086
    %vm1128 = vweird.f32 %v1122
    %vm1129 = vmor %vm1127, %vm1128
    %v1130 = vsel %vm1129, %v1122, %v1126
    %v1131 = vand.u32 2147483647, %v1086
    %vm1132 = vcmp.eq.f32.partialorder %v1131, 8.507059e+37
    %v1133 = vand.u32 %v1086, 2147483648
    %v1134 = vor.u32 1.1754944e-38, %v1133
    %v1135 = vsel %vm1132, %v1134, %v1130
    %v1136 = vmul.f32 1.0, %v1135
    %v1137 = vrcp.pop %v1087
    %v1138 = vmul.f32 %v1087, %v1137
    %v1139 = vsub.f32 1.0, %v1138
    %v1140 = vmul.f32 %v1137, %v1139
    %v1141 = vadd.f32 %v1137, %v1140
    %vm1142 = vweird.f32 %v1087
    %vm1143 = vweird.f32 %v1137
    %vm1144 = vmor %vm1142, %vm1143
    %v1145 = vsel %vm1144, %v1137, %v1141
    %v1146 = vand.u32 2147483647, %v1087
    %vm1147 = vcmp.eq.f32.partialorder %v1146, 8.507059e+37
    %v1148 = vand.u32 %v1087, 2147483648
    %v1149 = vor.u32 1.1754944e-38, %v1148
    %v1150 = vsel %vm1147, %v1149, %v1145
    %v1151 = vmul.f32 1.0, %v1150
    %v1152 = vrcp.pop %v1088
    %v1153 = vmul.f32 %v1088, %v1152
    %v1154 = vsub.f32 1.0, %v1153
    %v1155 = vmul.f32 %v1152, %v1154
    %v1156 = vadd.f32 %v1152, %v1155
    %vm1157 = vweird.f32 %v1088
    %vm1158 = vweird.f32 %v1152
    %vm1159 = vmor %vm1157, %vm1158
    %v1160 = vsel %vm1159, %v1152, %v1156
    %v1161 = vand.u32 2147483647, %v1088
    %vm1162 = vcmp.eq.f32.partialorder %v1161, 8.507059e+37
    %v1163 = vand.u32 %v1088, 2147483648
    %v1164 = vor.u32 1.1754944e-38, %v1163
    %v1165 = vsel %vm1162, %v1164, %v1160
    %v1166 = vmul.f32 1.0, %v1165
    %v1167 = vrcp.pop %v1089
    %v1168 = vmul.f32 %v1089, %v1167
    %v1169 = vsub.f32 1.0, %v1168
    %v1170 = vmul.f32 %v1167, %v1169
    %v1171 = vadd.f32 %v1167, %v1170
    %vm1172 = vweird.f32 %v1089
    %vm1173 = vweird.f32 %v1167
    %vm1174 = vmor %vm1172, %vm1173
    %v1175 = vsel %vm1174, %v1167, %v1171
    %v1176 = vand.u32 2147483647, %v1089
    %vm1177 = vcmp.eq.f32.partialorder %v1176, 8.507059e+37
    %v1178 = vand.u32 %v1089, 2147483648
    %v1179 = vor.u32 1.1754944e-38, %v1178
    %v1180 = vsel %vm1177, %v1179, %v1175
    %v1181 = vmul.f32 1.0, %v1180
    %v1182 = vrcp.pop %v1090
    %v1183 = vmul.f32 %v1090, %v1182
    %v1184 = vsub.f32 1.0, %v1183
    %v1185 = vmul.f32 %v1182, %v1184
    %v1186 = vadd.f32 %v1182, %v1185
    %vm1187 = vweird.f32 %v1090
    %vm1188 = vweird.f32 %v1182
    %vm1189 = vmor %vm1187, %vm1188
    %v1190 = vsel %vm1189, %v1182, %v1186
    %v1191 = vand.u32 2147483647, %v1090
    %vm1192 = vcmp.eq.f32.partialorder %v1191, 8.507059e+37
    %v1193 = vand.u32 %v1090, 2147483648
    %v1194 = vor.u32 1.1754944e-38, %v1193
    %v1195 = vsel %vm1192, %v1194, %v1190
    %v1196 = vmul.f32 1.0, %v1195
    %v1197 = vrcp.pop %v1091
    %v1198 = vmul.f32 %v1091, %v1197
    %v1199 = vsub.f32 1.0, %v1198
    %v1200 = vmul.f32 %v1197, %v1199
    %v1201 = vadd.f32 %v1197, %v1200
    %vm1202 = vweird.f32 %v1091
    %vm1203 = vweird.f32 %v1197
    %vm1204 = vmor %vm1202, %vm1203
    %v1205 = vsel %vm1204, %v1197, %v1201
    %v1206 = vand.u32 2147483647, %v1091
    %vm1207 = vcmp.eq.f32.partialorder %v1206, 8.507059e+37
    %v1208 = vand.u32 %v1091, 2147483648
    %v1209 = vor.u32 1.1754944e-38, %v1208
    %v1210 = vsel %vm1207, %v1209, %v1205
    %v1211 = vmul.f32 1.0, %v1210
    %1213 = vset.pattern.permute.xlu0 0
    %1214 = vperm.xlu0 %1213, %v1060
    %v1215 = vpop.permute.xlu0 %1214
    %1218 = vset.pattern.permute.xlu0 0
    %1219 = vperm.xlu0 %1218, %v1061
    %v1220 = vpop.permute.xlu0 %1219
    %1223 = vset.pattern.permute.xlu0 0
    %1224 = vperm.xlu0 %1223, %v1062
    %v1225 = vpop.permute.xlu0 %1224
    %1228 = vset.pattern.permute.xlu0 0
    %1229 = vperm.xlu0 %1228, %v1063
    %v1230 = vpop.permute.xlu0 %1229
    %1233 = vset.pattern.permute.xlu0 0
    %1234 = vperm.xlu0 %1233, %v1064
    %v1235 = vpop.permute.xlu0 %1234
    %1238 = vset.pattern.permute.xlu0 0
    %1239 = vperm.xlu0 %1238, %v1065
    %v1240 = vpop.permute.xlu0 %1239
    %1243 = vset.pattern.permute.xlu0 0
    %1244 = vperm.xlu0 %1243, %v1066
    %v1245 = vpop.permute.xlu0 %1244
    %1248 = vset.pattern.permute.xlu0 0
    %1249 = vperm.xlu0 %1248, %v1067
    %v1250 = vpop.permute.xlu0 %1249
    %v1252 = vmul.f32 %v1028, %v1215
    %v1253 = vmul.f32 %v1029, %v1220
    %v1254 = vmul.f32 %v1030, %v1225
    %v1255 = vmul.f32 %v1031, %v1230
    %v1256 = vmul.f32 %v1032, %v1235
    %v1257 = vmul.f32 %v1033, %v1240
    %v1258 = vmul.f32 %v1034, %v1245
    %v1259 = vmul.f32 %v1035, %v1250
    %v1260 = vrot.slane %v1252, 4
    %v1261 = vadd.f32 %v1252, %v1260
    %v1262 = vrot.slane %v1261, 2
    %v1263 = vadd.f32 %v1261, %v1262
    %v1264 = vrot.slane %v1263, 1
    %v1265 = vadd.f32 %v1263, %v1264
    %v1266 = vrot.slane %v1253, 4
    %v1267 = vadd.f32 %v1253, %v1266
    %v1268 = vrot.slane %v1267, 2
    %v1269 = vadd.f32 %v1267, %v1268
    %v1270 = vrot.slane %v1269, 1
    %v1271 = vadd.f32 %v1269, %v1270
    %v1272 = vrot.slane %v1254, 4
    %v1273 = vadd.f32 %v1254, %v1272
    %v1274 = vrot.slane %v1273, 2
    %v1275 = vadd.f32 %v1273, %v1274
    %v1276 = vrot.slane %v1275, 1
    %v1277 = vadd.f32 %v1275, %v1276
    %v1278 = vrot.slane %v1255, 4
    %v1279 = vadd.f32 %v1255, %v1278
    %v1280 = vrot.slane %v1279, 2
    %v1281 = vadd.f32 %v1279, %v1280
    %v1282 = vrot.slane %v1281, 1
    %v1283 = vadd.f32 %v1281, %v1282
    %v1284 = vrot.slane %v1256, 4
    %v1285 = vadd.f32 %v1256, %v1284
    %v1286 = vrot.slane %v1285, 2
    %v1287 = vadd.f32 %v1285, %v1286
    %v1288 = vrot.slane %v1287, 1
    %v1289 = vadd.f32 %v1287, %v1288
    %v1290 = vrot.slane %v1257, 4
    %v1291 = vadd.f32 %v1257, %v1290
    %v1292 = vrot.slane %v1291, 2
    %v1293 = vadd.f32 %v1291, %v1292
    %v1294 = vrot.slane %v1293, 1
    %v1295 = vadd.f32 %v1293, %v1294
    %v1296 = vrot.slane %v1258, 4
    %v1297 = vadd.f32 %v1258, %v1296
    %v1298 = vrot.slane %v1297, 2
    %v1299 = vadd.f32 %v1297, %v1298
    %v1300 = vrot.slane %v1299, 1
    %v1301 = vadd.f32 %v1299, %v1300
    %v1302 = vrot.slane %v1259, 4
    %v1303 = vadd.f32 %v1259, %v1302
    %v1304 = vrot.slane %v1303, 2
    %v1305 = vadd.f32 %v1303, %v1304
    %v1306 = vrot.slane %v1305, 1
    %v1307 = vadd.f32 %v1305, %v1306
    %1309 = vset.pattern.permute.xlu0 0
    %1310 = vperm.xlu0 %1309, %v1106
    %v1311 = vpop.permute.xlu0 %1310
    %1314 = vset.pattern.permute.xlu0 0
    %1315 = vperm.xlu0 %1314, %v1121
    %v1316 = vpop.permute.xlu0 %1315
    %1319 = vset.pattern.permute.xlu0 0
    %1320 = vperm.xlu0 %1319, %v1136
    %v1321 = vpop.permute.xlu0 %1320
    %1324 = vset.pattern.permute.xlu0 0
    %1325 = vperm.xlu0 %1324, %v1151
    %v1326 = vpop.permute.xlu0 %1325
    %1329 = vset.pattern.permute.xlu0 0
    %1330 = vperm.xlu0 %1329, %v1166
    %v1331 = vpop.permute.xlu0 %1330
    %1334 = vset.pattern.permute.xlu0 0
    %1335 = vperm.xlu0 %1334, %v1181
    %v1336 = vpop.permute.xlu0 %1335
    %1339 = vset.pattern.permute.xlu0 0
    %1340 = vperm.xlu0 %1339, %v1196
    %v1341 = vpop.permute.xlu0 %1340
    %1344 = vset.pattern.permute.xlu0 0
    %1345 = vperm.xlu0 %1344, %v1211
    %v1346 = vpop.permute.xlu0 %1345
    %v1348 = vmul.f32 %v1265, %v1311
    %v1349 = vmul.f32 %v1271, %v1316
    %v1350 = vmul.f32 %v1277, %v1321
    %v1351 = vmul.f32 %v1283, %v1326
    %v1352 = vmul.f32 %v1289, %v1331
    %v1353 = vmul.f32 %v1295, %v1336
    %v1354 = vmul.f32 %v1301, %v1341
    %v1355 = vmul.f32 %v1307, %v1346
    %s1356 = scalar_lea.vmem [#allocation4], 32
    %v1357 = vld [vmem:[%s1356] sm:$0xf]
    %v1358 = vld [vmem:[%s1356 + $0x4] sm:$0xf]
    %v1359 = vld [vmem:[%s1356 + $0x8] sm:$0xf]
    %v1360 = vld [vmem:[%s1356 + $0xc] sm:$0xf]
    %v1361 = vld [vmem:[%s1356 + $0x10] sm:$0xf]
    %v1362 = vld [vmem:[%s1356 + $0x14] sm:$0xf]
    %v1363 = vld [vmem:[%s1356 + $0x18] sm:$0xf]
    %v1364 = vld [vmem:[%s1356 + $0x1c] sm:$0xf]
    %v1365 = vunpack.c.l.bf16 %v1357
    %v1366 = vunpack.c.l.bf16 %v1358
    %v1367 = vunpack.c.l.bf16 %v1359
    %v1368 = vunpack.c.l.bf16 %v1360
    %v1369 = vunpack.c.l.bf16 %v1361
    %v1370 = vunpack.c.l.bf16 %v1362
    %v1371 = vunpack.c.l.bf16 %v1363
    %v1372 = vunpack.c.l.bf16 %v1364
    %v1373 = vperm.slane %v52, 3
    %v1374 = vperm.slane %v53, 3
    %v1375 = vperm.slane %v54, 3
    %v1376 = vperm.slane %v55, 3
    %v1377 = vperm.slane %v56, 3
    %v1378 = vperm.slane %v57, 3
    %v1379 = vperm.slane %v58, 3
    %v1380 = vperm.slane %v59, 3
    %vm1381 = vcmp.lt.s32.totalorder %v421, %v1373
    %vm1382 = vcmp.lt.s32.totalorder %v421, %v1374
    %vm1383 = vcmp.lt.s32.totalorder %v421, %v1375
    %vm1384 = vcmp.lt.s32.totalorder %v421, %v1376
    %vm1385 = vcmp.lt.s32.totalorder %v421, %v1377
    %vm1386 = vcmp.lt.s32.totalorder %v421, %v1378
    %vm1387 = vcmp.lt.s32.totalorder %v421, %v1379
    %vm1388 = vcmp.lt.s32.totalorder %v421, %v1380
    %v1389 = vsel %vm1381, 1, 0
    %v1390 = vsel %vm1382, 1, 0
    %v1391 = vsel %vm1383, 1, 0
    %v1392 = vsel %vm1384, 1, 0
    %v1393 = vsel %vm1385, 1, 0
    %v1394 = vsel %vm1386, 1, 0
    %v1395 = vsel %vm1387, 1, 0
    %v1396 = vsel %vm1388, 1, 0
    %v1397 = vcvt.s32.f32 %v1389
    %v1398 = vcvt.s32.f32 %v1390
    %v1399 = vcvt.s32.f32 %v1391
    %v1400 = vcvt.s32.f32 %v1392
    %v1401 = vcvt.s32.f32 %v1393
    %v1402 = vcvt.s32.f32 %v1394
    %v1403 = vcvt.s32.f32 %v1395
    %v1404 = vcvt.s32.f32 %v1396
    %1406 = vset.pattern.permute.xlu0 0
    %1407 = vperm.xlu0 %1406, %v1397
    %v1408 = vpop.permute.xlu0 %1407
    %1411 = vset.pattern.permute.xlu0 0
    %1412 = vperm.xlu0 %1411, %v1398
    %v1413 = vpop.permute.xlu0 %1412
    %1416 = vset.pattern.permute.xlu0 0
    %1417 = vperm.xlu0 %1416, %v1399
    %v1418 = vpop.permute.xlu0 %1417
    %1421 = vset.pattern.permute.xlu0 0
    %1422 = vperm.xlu0 %1421, %v1400
    %v1423 = vpop.permute.xlu0 %1422
    %1426 = vset.pattern.permute.xlu0 0
    %1427 = vperm.xlu0 %1426, %v1401
    %v1428 = vpop.permute.xlu0 %1427
    %1431 = vset.pattern.permute.xlu0 0
    %1432 = vperm.xlu0 %1431, %v1402
    %v1433 = vpop.permute.xlu0 %1432
    %1436 = vset.pattern.permute.xlu0 0
    %1437 = vperm.xlu0 %1436, %v1403
    %v1438 = vpop.permute.xlu0 %1437
    %1441 = vset.pattern.permute.xlu0 0
    %1442 = vperm.xlu0 %1441, %v1404
    %v1443 = vpop.permute.xlu0 %1442
    %v1445 = vmul.f32 %v1365, %v1408
    %v1446 = vmul.f32 %v1366, %v1413
    %v1447 = vmul.f32 %v1367, %v1418
    %v1448 = vmul.f32 %v1368, %v1423
    %v1449 = vmul.f32 %v1369, %v1428
    %v1450 = vmul.f32 %v1370, %v1433
    %v1451 = vmul.f32 %v1371, %v1438
    %v1452 = vmul.f32 %v1372, %v1443
    %v1453 = vrot.slane %v1445, 4
    %v1454 = vadd.f32 %v1445, %v1453
    %v1455 = vrot.slane %v1454, 2
    %v1456 = vadd.f32 %v1454, %v1455
    %v1457 = vrot.slane %v1456, 1
    %v1458 = vadd.f32 %v1456, %v1457
    %v1459 = vrot.slane %v1446, 4
    %v1460 = vadd.f32 %v1446, %v1459
    %v1461 = vrot.slane %v1460, 2
    %v1462 = vadd.f32 %v1460, %v1461
    %v1463 = vrot.slane %v1462, 1
    %v1464 = vadd.f32 %v1462, %v1463
    %v1465 = vrot.slane %v1447, 4
    %v1466 = vadd.f32 %v1447, %v1465
    %v1467 = vrot.slane %v1466, 2
    %v1468 = vadd.f32 %v1466, %v1467
    %v1469 = vrot.slane %v1468, 1
    %v1470 = vadd.f32 %v1468, %v1469
    %v1471 = vrot.slane %v1448, 4
    %v1472 = vadd.f32 %v1448, %v1471
    %v1473 = vrot.slane %v1472, 2
    %v1474 = vadd.f32 %v1472, %v1473
    %v1475 = vrot.slane %v1474, 1
    %v1476 = vadd.f32 %v1474, %v1475
    %v1477 = vrot.slane %v1449, 4
    %v1478 = vadd.f32 %v1449, %v1477
    %v1479 = vrot.slane %v1478, 2
    %v1480 = vadd.f32 %v1478, %v1479
    %v1481 = vrot.slane %v1480, 1
    %v1482 = vadd.f32 %v1480, %v1481
    %v1483 = vrot.slane %v1450, 4
    %v1484 = vadd.f32 %v1450, %v1483
    %v1485 = vrot.slane %v1484, 2
    %v1486 = vadd.f32 %v1484, %v1485
    %v1487 = vrot.slane %v1486, 1
    %v1488 = vadd.f32 %v1486, %v1487
    %v1489 = vrot.slane %v1451, 4
    %v1490 = vadd.f32 %v1451, %v1489
    %v1491 = vrot.slane %v1490, 2
    %v1492 = vadd.f32 %v1490, %v1491
    %v1493 = vrot.slane %v1492, 1
    %v1494 = vadd.f32 %v1492, %v1493
    %v1495 = vrot.slane %v1452, 4
    %v1496 = vadd.f32 %v1452, %v1495
    %v1497 = vrot.slane %v1496, 2
    %v1498 = vadd.f32 %v1496, %v1497
    %v1499 = vrot.slane %v1498, 1
    %v1500 = vadd.f32 %v1498, %v1499
    %v1501 = vmul.f32 %v1458, %v1311
    %v1502 = vmul.f32 %v1464, %v1316
    %v1503 = vmul.f32 %v1470, %v1321
    %v1504 = vmul.f32 %v1476, %v1326
    %v1505 = vmul.f32 %v1482, %v1331
    %v1506 = vmul.f32 %v1488, %v1336
    %v1507 = vmul.f32 %v1494, %v1341
    %v1508 = vmul.f32 %v1500, %v1346
    %s1509 = scalar_lea.vmem [#allocation4], 64
    %v1510 = vld [vmem:[%s1509] sm:$0xf]
    %v1511 = vld [vmem:[%s1509 + $0x4] sm:$0xf]
    %v1512 = vld [vmem:[%s1509 + $0x8] sm:$0xf]
    %v1513 = vld [vmem:[%s1509 + $0xc] sm:$0xf]
    %v1514 = vld [vmem:[%s1509 + $0x10] sm:$0xf]
    %v1515 = vld [vmem:[%s1509 + $0x14] sm:$0xf]
    %v1516 = vld [vmem:[%s1509 + $0x18] sm:$0xf]
    %v1517 = vld [vmem:[%s1509 + $0x1c] sm:$0xf]
    %v1518 = vunpack.c.l.bf16 %v1510
    %v1519 = vunpack.c.l.bf16 %v1511
    %v1520 = vunpack.c.l.bf16 %v1512
    %v1521 = vunpack.c.l.bf16 %v1513
    %v1522 = vunpack.c.l.bf16 %v1514
    %v1523 = vunpack.c.l.bf16 %v1515
    %v1524 = vunpack.c.l.bf16 %v1516
    %v1525 = vunpack.c.l.bf16 %v1517
    %v1526 = vperm.slane %v52, 4
    %v1527 = vperm.slane %v53, 4
    %v1528 = vperm.slane %v54, 4
    %v1529 = vperm.slane %v55, 4
    %v1530 = vperm.slane %v56, 4
    %v1531 = vperm.slane %v57, 4
    %v1532 = vperm.slane %v58, 4
    %v1533 = vperm.slane %v59, 4
    %vm1534 = vcmp.lt.s32.totalorder %v421, %v1526
    %vm1535 = vcmp.lt.s32.totalorder %v421, %v1527
    %vm1536 = vcmp.lt.s32.totalorder %v421, %v1528
    %vm1537 = vcmp.lt.s32.totalorder %v421, %v1529
    %vm1538 = vcmp.lt.s32.totalorder %v421, %v1530
    %vm1539 = vcmp.lt.s32.totalorder %v421, %v1531
    %vm1540 = vcmp.lt.s32.totalorder %v421, %v1532
    %vm1541 = vcmp.lt.s32.totalorder %v421, %v1533
    %v1542 = vsel %vm1534, 1, 0
    %v1543 = vsel %vm1535, 1, 0
    %v1544 = vsel %vm1536, 1, 0
    %v1545 = vsel %vm1537, 1, 0
    %v1546 = vsel %vm1538, 1, 0
    %v1547 = vsel %vm1539, 1, 0
    %v1548 = vsel %vm1540, 1, 0
    %v1549 = vsel %vm1541, 1, 0
    %v1550 = vcvt.s32.f32 %v1542
    %v1551 = vcvt.s32.f32 %v1543
    %v1552 = vcvt.s32.f32 %v1544
    %v1553 = vcvt.s32.f32 %v1545
    %v1554 = vcvt.s32.f32 %v1546
    %v1555 = vcvt.s32.f32 %v1547
    %v1556 = vcvt.s32.f32 %v1548
    %v1557 = vcvt.s32.f32 %v1549
    %1559 = vset.pattern.permute.xlu0 0
    %1560 = vperm.xlu0 %1559, %v1550
    %v1561 = vpop.permute.xlu0 %1560
    %1564 = vset.pattern.permute.xlu0 0
    %1565 = vperm.xlu0 %1564, %v1551
    %v1566 = vpop.permute.xlu0 %1565
    %1569 = vset.pattern.permute.xlu0 0
    %1570 = vperm.xlu0 %1569, %v1552
    %v1571 = vpop.permute.xlu0 %1570
    %1574 = vset.pattern.permute.xlu0 0
    %1575 = vperm.xlu0 %1574, %v1553
    %v1576 = vpop.permute.xlu0 %1575
    %1579 = vset.pattern.permute.xlu0 0
    %1580 = vperm.xlu0 %1579, %v1554
    %v1581 = vpop.permute.xlu0 %1580
    %1584 = vset.pattern.permute.xlu0 0
    %1585 = vperm.xlu0 %1584, %v1555
    %v1586 = vpop.permute.xlu0 %1585
    %1589 = vset.pattern.permute.xlu0 0
    %1590 = vperm.xlu0 %1589, %v1556
    %v1591 = vpop.permute.xlu0 %1590
    %1594 = vset.pattern.permute.xlu0 0
    %1595 = vperm.xlu0 %1594, %v1557
    %v1596 = vpop.permute.xlu0 %1595
    %v1598 = vmul.f32 %v1518, %v1561
    %v1599 = vmul.f32 %v1519, %v1566
    %v1600 = vmul.f32 %v1520, %v1571
    %v1601 = vmul.f32 %v1521, %v1576
    %v1602 = vmul.f32 %v1522, %v1581
    %v1603 = vmul.f32 %v1523, %v1586
    %v1604 = vmul.f32 %v1524, %v1591
    %v1605 = vmul.f32 %v1525, %v1596
    %v1606 = vrot.slane %v1598, 4
    %v1607 = vadd.f32 %v1598, %v1606
    %v1608 = vrot.slane %v1607, 2
    %v1609 = vadd.f32 %v1607, %v1608
    %v1610 = vrot.slane %v1609, 1
    %v1611 = vadd.f32 %v1609, %v1610
    %v1612 = vrot.slane %v1599, 4
    %v1613 = vadd.f32 %v1599, %v1612
    %v1614 = vrot.slane %v1613, 2
    %v1615 = vadd.f32 %v1613, %v1614
    %v1616 = vrot.slane %v1615, 1
    %v1617 = vadd.f32 %v1615, %v1616
    %v1618 = vrot.slane %v1600, 4
    %v1619 = vadd.f32 %v1600, %v1618
    %v1620 = vrot.slane %v1619, 2
    %v1621 = vadd.f32 %v1619, %v1620
    %v1622 = vrot.slane %v1621, 1
    %v1623 = vadd.f32 %v1621, %v1622
    %v1624 = vrot.slane %v1601, 4
    %v1625 = vadd.f32 %v1601, %v1624
    %v1626 = vrot.slane %v1625, 2
    %v1627 = vadd.f32 %v1625, %v1626
    %v1628 = vrot.slane %v1627, 1
    %v1629 = vadd.f32 %v1627, %v1628
    %v1630 = vrot.slane %v1602, 4
    %v1631 = vadd.f32 %v1602, %v1630
    %v1632 = vrot.slane %v1631, 2
    %v1633 = vadd.f32 %v1631, %v1632
    %v1634 = vrot.slane %v1633, 1
    %v1635 = vadd.f32 %v1633, %v1634
    %v1636 = vrot.slane %v1603, 4
    %v1637 = vadd.f32 %v1603, %v1636
    %v1638 = vrot.slane %v1637, 2
    %v1639 = vadd.f32 %v1637, %v1638
    %v1640 = vrot.slane %v1639, 1
    %v1641 = vadd.f32 %v1639, %v1640
    %v1642 = vrot.slane %v1604, 4
    %v1643 = vadd.f32 %v1604, %v1642
    %v1644 = vrot.slane %v1643, 2
    %v1645 = vadd.f32 %v1643, %v1644
    %v1646 = vrot.slane %v1645, 1
    %v1647 = vadd.f32 %v1645, %v1646
    %v1648 = vrot.slane %v1605, 4
    %v1649 = vadd.f32 %v1605, %v1648
    %v1650 = vrot.slane %v1649, 2
    %v1651 = vadd.f32 %v1649, %v1650
    %v1652 = vrot.slane %v1651, 1
    %v1653 = vadd.f32 %v1651, %v1652
    %v1654 = vmul.f32 %v1611, %v1311
    %v1655 = vmul.f32 %v1617, %v1316
    %v1656 = vmul.f32 %v1623, %v1321
    %v1657 = vmul.f32 %v1629, %v1326
    %v1658 = vmul.f32 %v1635, %v1331
    %v1659 = vmul.f32 %v1641, %v1336
    %v1660 = vmul.f32 %v1647, %v1341
    %v1661 = vmul.f32 %v1653, %v1346
    %v1662 = vmul.f32 %v1348, %v1348
    %v1663 = vmul.f32 %v1349, %v1349
    %v1664 = vmul.f32 %v1350, %v1350
    %v1665 = vmul.f32 %v1351, %v1351
    %v1666 = vmul.f32 %v1352, %v1352
    %v1667 = vmul.f32 %v1353, %v1353
    %v1668 = vmul.f32 %v1354, %v1354
    %v1669 = vmul.f32 %v1355, %v1355
    %vm1670 = vcmask 1042434
    %v1671 = vsel %vm1670, %v1662, 0.0
    %1672 = vadd.xlane.f32.xlu0 %v1671
    %v1673 = vpop.xlane.xlu0 %1672
    %v1674 = vsel %vm1670, %v1663, 0.0
    %1675 = vadd.xlane.f32.xlu0 %v1674
    %v1676 = vpop.xlane.xlu0 %1675
    %v1677 = vsel %vm1670, %v1664, 0.0
    %1678 = vadd.xlane.f32.xlu0 %v1677
    %v1679 = vpop.xlane.xlu0 %1678
    %v1680 = vsel %vm1670, %v1665, 0.0
    %1681 = vadd.xlane.f32.xlu0 %v1680
    %v1682 = vpop.xlane.xlu0 %1681
    %v1683 = vsel %vm1670, %v1666, 0.0
    %1684 = vadd.xlane.f32.xlu0 %v1683
    %v1685 = vpop.xlane.xlu0 %1684
    %v1686 = vsel %vm1670, %v1667, 0.0
    %1687 = vadd.xlane.f32.xlu0 %v1686
    %v1688 = vpop.xlane.xlu0 %1687
    %v1689 = vsel %vm1670, %v1668, 0.0
    %1690 = vadd.xlane.f32.xlu0 %v1689
    %v1691 = vpop.xlane.xlu0 %1690
    %v1692 = vsel %vm1670, %v1669, 0.0
    %1693 = vadd.xlane.f32.xlu0 %v1692
    %v1694 = vpop.xlane.xlu0 %1693
    %v1695 = vmax.f32 %v1673, 1e-16
    %v1696 = vmax.f32 %v1676, 1e-16
    %v1697 = vmax.f32 %v1679, 1e-16
    %v1698 = vmax.f32 %v1682, 1e-16
    %v1699 = vmax.f32 %v1685, 1e-16
    %v1700 = vmax.f32 %v1688, 1e-16
    %v1701 = vmax.f32 %v1691, 1e-16
    %v1702 = vmax.f32 %v1694, 1e-16
    %v1703 = vrsqrt.pop %v1695
    %v1704 = vmul.f32 %v1703, %v1695
    %v1705 = vmul.f32 %v1704, %v1703
    %v1706 = vmul.f32 0.5, %v1705
    %v1707 = vsub.f32 1.5, %v1706
    %v1708 = vmul.f32 %v1703, %v1707
    %vm1709 = vweird.f32 %v1695
    %vm1710 = vweird.f32 %v1703
    %vm1711 = vmor %vm1709, %vm1710
    %v1712 = vsel %vm1711, %v1703, %v1708
    %v1713 = vrsqrt.pop %v1696
    %v1714 = vmul.f32 %v1713, %v1696
    %v1715 = vmul.f32 %v1714, %v1713
    %v1716 = vmul.f32 0.5, %v1715
    %v1717 = vsub.f32 1.5, %v1716
    %v1718 = vmul.f32 %v1713, %v1717
    %vm1719 = vweird.f32 %v1696
    %vm1720 = vweird.f32 %v1713
    %vm1721 = vmor %vm1719, %vm1720
    %v1722 = vsel %vm1721, %v1713, %v1718
    %v1723 = vrsqrt.pop %v1697
    %v1724 = vmul.f32 %v1723, %v1697
    %v1725 = vmul.f32 %v1724, %v1723
    %v1726 = vmul.f32 0.5, %v1725
    %v1727 = vsub.f32 1.5, %v1726
    %v1728 = vmul.f32 %v1723, %v1727
    %vm1729 = vweird.f32 %v1697
    %vm1730 = vweird.f32 %v1723
    %vm1731 = vmor %vm1729, %vm1730
    %v1732 = vsel %vm1731, %v1723, %v1728
    %v1733 = vrsqrt.pop %v1698
    %v1734 = vmul.f32 %v1733, %v1698
    %v1735 = vmul.f32 %v1734, %v1733
    %v1736 = vmul.f32 0.5, %v1735
    %v1737 = vsub.f32 1.5, %v1736
    %v1738 = vmul.f32 %v1733, %v1737
    %vm1739 = vweird.f32 %v1698
    %vm1740 = vweird.f32 %v1733
    %vm1741 = vmor %vm1739, %vm1740
    %v1742 = vsel %vm1741, %v1733, %v1738
    %v1743 = vrsqrt.pop %v1699
    %v1744 = vmul.f32 %v1743, %v1699
    %v1745 = vmul.f32 %v1744, %v1743
    %v1746 = vmul.f32 0.5, %v1745
    %v1747 = vsub.f32 1.5, %v1746
    %v1748 = vmul.f32 %v1743, %v1747
    %vm1749 = vweird.f32 %v1699
    %vm1750 = vweird.f32 %v1743
    %vm1751 = vmor %vm1749, %vm1750
    %v1752 = vsel %vm1751, %v1743, %v1748
    %v1753 = vrsqrt.pop %v1700
    %v1754 = vmul.f32 %v1753, %v1700
    %v1755 = vmul.f32 %v1754, %v1753
    %v1756 = vmul.f32 0.5, %v1755
    %v1757 = vsub.f32 1.5, %v1756
    %v1758 = vmul.f32 %v1753, %v1757
    %vm1759 = vweird.f32 %v1700
    %vm1760 = vweird.f32 %v1753
    %vm1761 = vmor %vm1759, %vm1760
    %v1762 = vsel %vm1761, %v1753, %v1758
    %v1763 = vrsqrt.pop %v1701
    %v1764 = vmul.f32 %v1763, %v1701
    %v1765 = vmul.f32 %v1764, %v1763
    %v1766 = vmul.f32 0.5, %v1765
    %v1767 = vsub.f32 1.5, %v1766
    %v1768 = vmul.f32 %v1763, %v1767
    %vm1769 = vweird.f32 %v1701
    %vm1770 = vweird.f32 %v1763
    %vm1771 = vmor %vm1769, %vm1770
    %v1772 = vsel %vm1771, %v1763, %v1768
    %v1773 = vrsqrt.pop %v1702
    %v1774 = vmul.f32 %v1773, %v1702
    %v1775 = vmul.f32 %v1774, %v1773
    %v1776 = vmul.f32 0.5, %v1775
    %v1777 = vsub.f32 1.5, %v1776
    %v1778 = vmul.f32 %v1773, %v1777
    %vm1779 = vweird.f32 %v1702
    %vm1780 = vweird.f32 %v1773
    %vm1781 = vmor %vm1779, %vm1780
    %v1782 = vsel %vm1781, %v1773, %v1778
    %v1791 = vrot.slane %v1501, 1
    %v1792 = vrot.slane %v1502, 1
    %v1793 = vrot.slane %v1503, 1
    %v1794 = vrot.slane %v1504, 1
    %v1795 = vrot.slane %v1505, 1
    %v1796 = vrot.slane %v1506, 1
    %v1797 = vrot.slane %v1507, 1
    %v1798 = vrot.slane %v1508, 1
    %v1807 = vmul.f32 %v1348, %v1791
    %v1808 = vmul.f32 %v1349, %v1792
    %v1809 = vmul.f32 %v1350, %v1793
    %v1810 = vmul.f32 %v1351, %v1794
    %v1811 = vmul.f32 %v1352, %v1795
    %v1812 = vmul.f32 %v1353, %v1796
    %v1813 = vmul.f32 %v1354, %v1797
    %v1814 = vmul.f32 %v1355, %v1798
    %v1815 = vsel %vm1670, %v1807, 0.0
    %1816 = vadd.xlane.f32.xlu0 %v1815
    %v1817 = vpop.xlane.xlu0 %1816
    %v1818 = vsel %vm1670, %v1808, 0.0
    %1819 = vadd.xlane.f32.xlu0 %v1818
    %v1820 = vpop.xlane.xlu0 %1819
    %v1821 = vsel %vm1670, %v1809, 0.0
    %1822 = vadd.xlane.f32.xlu0 %v1821
    %v1823 = vpop.xlane.xlu0 %1822
    %v1824 = vsel %vm1670, %v1810, 0.0
    %1825 = vadd.xlane.f32.xlu0 %v1824
    %v1826 = vpop.xlane.xlu0 %1825
    %v1827 = vsel %vm1670, %v1811, 0.0
    %1828 = vadd.xlane.f32.xlu0 %v1827
    %v1829 = vpop.xlane.xlu0 %1828
    %v1830 = vsel %vm1670, %v1812, 0.0
    %1831 = vadd.xlane.f32.xlu0 %v1830
    %v1832 = vpop.xlane.xlu0 %1831
    %v1833 = vsel %vm1670, %v1813, 0.0
    %1834 = vadd.xlane.f32.xlu0 %v1833
    %v1835 = vpop.xlane.xlu0 %1834
    %v1836 = vsel %vm1670, %v1814, 0.0
    %1837 = vadd.xlane.f32.xlu0 %v1836
    %v1838 = vpop.xlane.xlu0 %1837
    %v1839 = vmul.f32 %v1817, %v1712
    %v1840 = vmul.f32 %v1820, %v1722
    %v1841 = vmul.f32 %v1823, %v1732
    %v1842 = vmul.f32 %v1826, %v1742
    %v1843 = vmul.f32 %v1829, %v1752
    %v1844 = vmul.f32 %v1832, %v1762
    %v1845 = vmul.f32 %v1835, %v1772
    %v1846 = vmul.f32 %v1838, %v1782
    %v1847 = vmul.f32 %v1501, %v1501
    %v1848 = vmul.f32 %v1502, %v1502
    %v1849 = vmul.f32 %v1503, %v1503
    %v1850 = vmul.f32 %v1504, %v1504
    %v1851 = vmul.f32 %v1505, %v1505
    %v1852 = vmul.f32 %v1506, %v1506
    %v1853 = vmul.f32 %v1507, %v1507
    %v1854 = vmul.f32 %v1508, %v1508
    %vm1855 = vcmask 1043459
    %v1856 = vsel %vm1855, %v1847, 0.0
    %1857 = vadd.xlane.f32.xlu0 %v1856
    %v1858 = vpop.xlane.xlu0 %1857
    %v1859 = vsel %vm1855, %v1848, 0.0
    %1860 = vadd.xlane.f32.xlu0 %v1859
    %v1861 = vpop.xlane.xlu0 %1860
    %v1862 = vsel %vm1855, %v1849, 0.0
    %1863 = vadd.xlane.f32.xlu0 %v1862
    %v1864 = vpop.xlane.xlu0 %1863
    %v1865 = vsel %vm1855, %v1850, 0.0
    %1866 = vadd.xlane.f32.xlu0 %v1865
    %v1867 = vpop.xlane.xlu0 %1866
    %v1868 = vsel %vm1855, %v1851, 0.0
    %1869 = vadd.xlane.f32.xlu0 %v1868
    %v1870 = vpop.xlane.xlu0 %1869
    %v1871 = vsel %vm1855, %v1852, 0.0
    %1872 = vadd.xlane.f32.xlu0 %v1871
    %v1873 = vpop.xlane.xlu0 %1872
    %v1874 = vsel %vm1855, %v1853, 0.0
    %1875 = vadd.xlane.f32.xlu0 %v1874
    %v1876 = vpop.xlane.xlu0 %1875
    %v1877 = vsel %vm1855, %v1854, 0.0
    %1878 = vadd.xlane.f32.xlu0 %v1877
    %v1879 = vpop.xlane.xlu0 %1878
    %v1880 = vmax.f32 %v1858, 1e-16
    %v1881 = vmax.f32 %v1861, 1e-16
    %v1882 = vmax.f32 %v1864, 1e-16
    %v1883 = vmax.f32 %v1867, 1e-16
    %v1884 = vmax.f32 %v1870, 1e-16
    %v1885 = vmax.f32 %v1873, 1e-16
    %v1886 = vmax.f32 %v1876, 1e-16
    %v1887 = vmax.f32 %v1879, 1e-16
    %v1888 = vrsqrt.pop %v1880
    %v1889 = vmul.f32 %v1888, %v1880
    %v1890 = vmul.f32 %v1889, %v1888
    %v1891 = vmul.f32 0.5, %v1890
    %v1892 = vsub.f32 1.5, %v1891
    %v1893 = vmul.f32 %v1888, %v1892
    %vm1894 = vweird.f32 %v1880
    %vm1895 = vweird.f32 %v1888
    %vm1896 = vmor %vm1894, %vm1895
    %v1897 = vsel %vm1896, %v1888, %v1893
    %v1898 = vrsqrt.pop %v1881
    %v1899 = vmul.f32 %v1898, %v1881
    %v1900 = vmul.f32 %v1899, %v1898
    %v1901 = vmul.f32 0.5, %v1900
    %v1902 = vsub.f32 1.5, %v1901
    %v1903 = vmul.f32 %v1898, %v1902
    %vm1904 = vweird.f32 %v1881
    %vm1905 = vweird.f32 %v1898
    %vm1906 = vmor %vm1904, %vm1905
    %v1907 = vsel %vm1906, %v1898, %v1903
    %v1908 = vrsqrt.pop %v1882
    %v1909 = vmul.f32 %v1908, %v1882
    %v1910 = vmul.f32 %v1909, %v1908
    %v1911 = vmul.f32 0.5, %v1910
    %v1912 = vsub.f32 1.5, %v1911
    %v1913 = vmul.f32 %v1908, %v1912
    %vm1914 = vweird.f32 %v1882
    %vm1915 = vweird.f32 %v1908
    %vm1916 = vmor %vm1914, %vm1915
    %v1917 = vsel %vm1916, %v1908, %v1913
    %v1918 = vrsqrt.pop %v1883
    %v1919 = vmul.f32 %v1918, %v1883
    %v1920 = vmul.f32 %v1919, %v1918
    %v1921 = vmul.f32 0.5, %v1920
    %v1922 = vsub.f32 1.5, %v1921
    %v1923 = vmul.f32 %v1918, %v1922
    %vm1924 = vweird.f32 %v1883
    %vm1925 = vweird.f32 %v1918
    %vm1926 = vmor %vm1924, %vm1925
    %v1927 = vsel %vm1926, %v1918, %v1923
    %v1928 = vrsqrt.pop %v1884
    %v1929 = vmul.f32 %v1928, %v1884
    %v1930 = vmul.f32 %v1929, %v1928
    %v1931 = vmul.f32 0.5, %v1930
    %v1932 = vsub.f32 1.5, %v1931
    %v1933 = vmul.f32 %v1928, %v1932
    %vm1934 = vweird.f32 %v1884
    %vm1935 = vweird.f32 %v1928
    %vm1936 = vmor %vm1934, %vm1935
    %v1937 = vsel %vm1936, %v1928, %v1933
    %v1938 = vrsqrt.pop %v1885
    %v1939 = vmul.f32 %v1938, %v1885
    %v1940 = vmul.f32 %v1939, %v1938
    %v1941 = vmul.f32 0.5, %v1940
    %v1942 = vsub.f32 1.5, %v1941
    %v1943 = vmul.f32 %v1938, %v1942
    %vm1944 = vweird.f32 %v1885
    %vm1945 = vweird.f32 %v1938
    %vm1946 = vmor %vm1944, %vm1945
    %v1947 = vsel %vm1946, %v1938, %v1943
    %v1948 = vrsqrt.pop %v1886
    %v1949 = vmul.f32 %v1948, %v1886
    %v1950 = vmul.f32 %v1949, %v1948
    %v1951 = vmul.f32 0.5, %v1950
    %v1952 = vsub.f32 1.5, %v1951
    %v1953 = vmul.f32 %v1948, %v1952
    %vm1954 = vweird.f32 %v1886
    %vm1955 = vweird.f32 %v1948
    %vm1956 = vmor %vm1954, %vm1955
    %v1957 = vsel %vm1956, %v1948, %v1953
    %v1958 = vrsqrt.pop %v1887
    %v1959 = vmul.f32 %v1958, %v1887
    %v1960 = vmul.f32 %v1959, %v1958
    %v1961 = vmul.f32 0.5, %v1960
    %v1962 = vsub.f32 1.5, %v1961
    %v1963 = vmul.f32 %v1958, %v1962
    %vm1964 = vweird.f32 %v1887
    %vm1965 = vweird.f32 %v1958
    %vm1966 = vmor %vm1964, %vm1965
    %v1967 = vsel %vm1966, %v1958, %v1963
    %v1976 = vrot.slane %v1897, 1
    %v1977 = vrot.slane %v1907, 1
    %v1978 = vrot.slane %v1917, 1
    %v1979 = vrot.slane %v1927, 1
    %v1980 = vrot.slane %v1937, 1
    %v1981 = vrot.slane %v1947, 1
    %v1982 = vrot.slane %v1957, 1
    %v1983 = vrot.slane %v1967, 1
    %v1992 = vmul.f32 %v1839, %v1976
    %v1993 = vmul.f32 %v1840, %v1977
    %v1994 = vmul.f32 %v1841, %v1978
    %v1995 = vmul.f32 %v1842, %v1979
    %v1996 = vmul.f32 %v1843, %v1980
    %v1997 = vmul.f32 %v1844, %v1981
    %v1998 = vmul.f32 %v1845, %v1982
    %v1999 = vmul.f32 %v1846, %v1983
    %v2008 = vrot.slane %v1992, 2
    %v2009 = vrot.slane %v1993, 2
    %v2010 = vrot.slane %v1994, 2
    %v2011 = vrot.slane %v1995, 2
    %v2012 = vrot.slane %v1996, 2
    %v2013 = vrot.slane %v1997, 2
    %v2014 = vrot.slane %v1998, 2
    %v2015 = vrot.slane %v1999, 2
    %v2024 = vadd.f32 %v868, %v2008
    %v2025 = vadd.f32 %v869, %v2009
    %v2026 = vadd.f32 %v870, %v2010
    %v2027 = vadd.f32 %v871, %v2011
    %v2028 = vadd.f32 %v872, %v2012
    %v2029 = vadd.f32 %v873, %v2013
    %v2030 = vadd.f32 %v874, %v2014
    %v2031 = vadd.f32 %v875, %v2015
    %v2040 = vrot.slane %v1654, 2
    %v2041 = vrot.slane %v1655, 2
    %v2042 = vrot.slane %v1656, 2
    %v2043 = vrot.slane %v1657, 2
    %v2044 = vrot.slane %v1658, 2
    %v2045 = vrot.slane %v1659, 2
    %v2046 = vrot.slane %v1660, 2
    %v2047 = vrot.slane %v1661, 2
    %v2056 = vmul.f32 %v1348, %v2040
    %v2057 = vmul.f32 %v1349, %v2041
    %v2058 = vmul.f32 %v1350, %v2042
    %v2059 = vmul.f32 %v1351, %v2043
    %v2060 = vmul.f32 %v1352, %v2044
    %v2061 = vmul.f32 %v1353, %v2045
    %v2062 = vmul.f32 %v1354, %v2046
    %v2063 = vmul.f32 %v1355, %v2047
    %v2064 = vsel %vm1670, %v2056, 0.0
    %2065 = vadd.xlane.f32.xlu0 %v2064
    %v2066 = vpop.xlane.xlu0 %2065
    %v2067 = vsel %vm1670, %v2057, 0.0
    %2068 = vadd.xlane.f32.xlu0 %v2067
    %v2069 = vpop.xlane.xlu0 %2068
    %v2070 = vsel %vm1670, %v2058, 0.0
    %2071 = vadd.xlane.f32.xlu0 %v2070
    %v2072 = vpop.xlane.xlu0 %2071
    %v2073 = vsel %vm1670, %v2059, 0.0
    %2074 = vadd.xlane.f32.xlu0 %v2073
    %v2075 = vpop.xlane.xlu0 %2074
    %v2076 = vsel %vm1670, %v2060, 0.0
    %2077 = vadd.xlane.f32.xlu0 %v2076
    %v2078 = vpop.xlane.xlu0 %2077
    %v2079 = vsel %vm1670, %v2061, 0.0
    %2080 = vadd.xlane.f32.xlu0 %v2079
    %v2081 = vpop.xlane.xlu0 %2080
    %v2082 = vsel %vm1670, %v2062, 0.0
    %2083 = vadd.xlane.f32.xlu0 %v2082
    %v2084 = vpop.xlane.xlu0 %2083
    %v2085 = vsel %vm1670, %v2063, 0.0
    %2086 = vadd.xlane.f32.xlu0 %v2085
    %v2087 = vpop.xlane.xlu0 %2086
    %v2088 = vmul.f32 %v2066, %v1712
    %v2089 = vmul.f32 %v2069, %v1722
    %v2090 = vmul.f32 %v2072, %v1732
    %v2091 = vmul.f32 %v2075, %v1742
    %v2092 = vmul.f32 %v2078, %v1752
    %v2093 = vmul.f32 %v2081, %v1762
    %v2094 = vmul.f32 %v2084, %v1772
    %v2095 = vmul.f32 %v2087, %v1782
    %v2096 = vmul.f32 %v1654, %v1654
    %v2097 = vmul.f32 %v1655, %v1655
    %v2098 = vmul.f32 %v1656, %v1656
    %v2099 = vmul.f32 %v1657, %v1657
    %v2100 = vmul.f32 %v1658, %v1658
    %v2101 = vmul.f32 %v1659, %v1659
    %v2102 = vmul.f32 %v1660, %v1660
    %v2103 = vmul.f32 %v1661, %v1661
    %vm2104 = vcmask 1044484
    %v2105 = vsel %vm2104, %v2096, 0.0
    %2106 = vadd.xlane.f32.xlu0 %v2105
    %v2107 = vpop.xlane.xlu0 %2106
    %v2108 = vsel %vm2104, %v2097, 0.0
    %2109 = vadd.xlane.f32.xlu0 %v2108
    %v2110 = vpop.xlane.xlu0 %2109
    %v2111 = vsel %vm2104, %v2098, 0.0
    %2112 = vadd.xlane.f32.xlu0 %v2111
    %v2113 = vpop.xlane.xlu0 %2112
    %v2114 = vsel %vm2104, %v2099, 0.0
    %2115 = vadd.xlane.f32.xlu0 %v2114
    %v2116 = vpop.xlane.xlu0 %2115
    %v2117 = vsel %vm2104, %v2100, 0.0
    %2118 = vadd.xlane.f32.xlu0 %v2117
    %v2119 = vpop.xlane.xlu0 %2118
    %v2120 = vsel %vm2104, %v2101, 0.0
    %2121 = vadd.xlane.f32.xlu0 %v2120
    %v2122 = vpop.xlane.xlu0 %2121
    %v2123 = vsel %vm2104, %v2102, 0.0
    %2124 = vadd.xlane.f32.xlu0 %v2123
    %v2125 = vpop.xlane.xlu0 %2124
    %v2126 = vsel %vm2104, %v2103, 0.0
    %2127 = vadd.xlane.f32.xlu0 %v2126
    %v2128 = vpop.xlane.xlu0 %2127
    %v2129 = vmax.f32 %v2107, 1e-16
    %v2130 = vmax.f32 %v2110, 1e-16
    %v2131 = vmax.f32 %v2113, 1e-16
    %v2132 = vmax.f32 %v2116, 1e-16
    %v2133 = vmax.f32 %v2119, 1e-16
    %v2134 = vmax.f32 %v2122, 1e-16
    %v2135 = vmax.f32 %v2125, 1e-16
    %v2136 = vmax.f32 %v2128, 1e-16
    %v2137 = vrsqrt.pop %v2129
    %v2138 = vmul.f32 %v2137, %v2129
    %v2139 = vmul.f32 %v2138, %v2137
    %v2140 = vmul.f32 0.5, %v2139
    %v2141 = vsub.f32 1.5, %v2140
    %v2142 = vmul.f32 %v2137, %v2141
    %vm2143 = vweird.f32 %v2129
    %vm2144 = vweird.f32 %v2137
    %vm2145 = vmor %vm2143, %vm2144
    %v2146 = vsel %vm2145, %v2137, %v2142
    %v2147 = vrsqrt.pop %v2130
    %v2148 = vmul.f32 %v2147, %v2130
    %v2149 = vmul.f32 %v2148, %v2147
    %v2150 = vmul.f32 0.5, %v2149
    %v2151 = vsub.f32 1.5, %v2150
    %v2152 = vmul.f32 %v2147, %v2151
    %vm2153 = vweird.f32 %v2130
    %vm2154 = vweird.f32 %v2147
    %vm2155 = vmor %vm2153, %vm2154
    %v2156 = vsel %vm2155, %v2147, %v2152
    %v2157 = vrsqrt.pop %v2131
    %v2158 = vmul.f32 %v2157, %v2131
    %v2159 = vmul.f32 %v2158, %v2157
    %v2160 = vmul.f32 0.5, %v2159
    %v2161 = vsub.f32 1.5, %v2160
    %v2162 = vmul.f32 %v2157, %v2161
    %vm2163 = vweird.f32 %v2131
    %vm2164 = vweird.f32 %v2157
    %vm2165 = vmor %vm2163, %vm2164
    %v2166 = vsel %vm2165, %v2157, %v2162
    %v2167 = vrsqrt.pop %v2132
    %v2168 = vmul.f32 %v2167, %v2132
    %v2169 = vmul.f32 %v2168, %v2167
    %v2170 = vmul.f32 0.5, %v2169
    %v2171 = vsub.f32 1.5, %v2170
    %v2172 = vmul.f32 %v2167, %v2171
    %vm2173 = vweird.f32 %v2132
    %vm2174 = vweird.f32 %v2167
    %vm2175 = vmor %vm2173, %vm2174
    %v2176 = vsel %vm2175, %v2167, %v2172
    %v2177 = vrsqrt.pop %v2133
    %v2178 = vmul.f32 %v2177, %v2133
    %v2179 = vmul.f32 %v2178, %v2177
    %v2180 = vmul.f32 0.5, %v2179
    %v2181 = vsub.f32 1.5, %v2180
    %v2182 = vmul.f32 %v2177, %v2181
    %vm2183 = vweird.f32 %v2133
    %vm2184 = vweird.f32 %v2177
    %vm2185 = vmor %vm2183, %vm2184
    %v2186 = vsel %vm2185, %v2177, %v2182
    %v2187 = vrsqrt.pop %v2134
    %v2188 = vmul.f32 %v2187, %v2134
    %v2189 = vmul.f32 %v2188, %v2187
    %v2190 = vmul.f32 0.5, %v2189
    %v2191 = vsub.f32 1.5, %v2190
    %v2192 = vmul.f32 %v2187, %v2191
    %vm2193 = vweird.f32 %v2134
    %vm2194 = vweird.f32 %v2187
    %vm2195 = vmor %vm2193, %vm2194
    %v2196 = vsel %vm2195, %v2187, %v2192
    %v2197 = vrsqrt.pop %v2135
    %v2198 = vmul.f32 %v2197, %v2135
    %v2199 = vmul.f32 %v2198, %v2197
    %v2200 = vmul.f32 0.5, %v2199
    %v2201 = vsub.f32 1.5, %v2200
    %v2202 = vmul.f32 %v2197, %v2201
    %vm2203 = vweird.f32 %v2135
    %vm2204 = vweird.f32 %v2197
    %vm2205 = vmor %vm2203, %vm2204
    %v2206 = vsel %vm2205, %v2197, %v2202
    %v2207 = vrsqrt.pop %v2136
    %v2208 = vmul.f32 %v2207, %v2136
    %v2209 = vmul.f32 %v2208, %v2207
    %v2210 = vmul.f32 0.5, %v2209
    %v2211 = vsub.f32 1.5, %v2210
    %v2212 = vmul.f32 %v2207, %v2211
    %vm2213 = vweird.f32 %v2136
    %vm2214 = vweird.f32 %v2207
    %vm2215 = vmor %vm2213, %vm2214
    %v2216 = vsel %vm2215, %v2207, %v2212
    %v2225 = vrot.slane %v2146, 2
    %v2226 = vrot.slane %v2156, 2
    %v2227 = vrot.slane %v2166, 2
    %v2228 = vrot.slane %v2176, 2
    %v2229 = vrot.slane %v2186, 2
    %v2230 = vrot.slane %v2196, 2
    %v2231 = vrot.slane %v2206, 2
    %v2232 = vrot.slane %v2216, 2
    %v2241 = vmul.f32 %v2088, %v2225
    %v2242 = vmul.f32 %v2089, %v2226
    %v2243 = vmul.f32 %v2090, %v2227
    %v2244 = vmul.f32 %v2091, %v2228
    %v2245 = vmul.f32 %v2092, %v2229
    %v2246 = vmul.f32 %v2093, %v2230
    %v2247 = vmul.f32 %v2094, %v2231
    %v2248 = vmul.f32 %v2095, %v2232
    %v2257 = vrot.slane %v2241, 2
    %v2258 = vrot.slane %v2242, 2
    %v2259 = vrot.slane %v2243, 2
    %v2260 = vrot.slane %v2244, 2
    %v2261 = vrot.slane %v2245, 2
    %v2262 = vrot.slane %v2246, 2
    %v2263 = vrot.slane %v2247, 2
    %v2264 = vrot.slane %v2248, 2
    %v2273 = vadd.f32 %v1012, %v2257
    %v2274 = vadd.f32 %v1013, %v2258
    %v2275 = vadd.f32 %v1014, %v2259
    %v2276 = vadd.f32 %v1015, %v2260
    %v2277 = vadd.f32 %v1016, %v2261
    %v2278 = vadd.f32 %v1017, %v2262
    %v2279 = vadd.f32 %v1018, %v2263
    %v2280 = vadd.f32 %v1019, %v2264
    %vm2281 = vcmp.gt.s32.totalorder %v52, 0
    %vm2282 = vcmp.gt.s32.totalorder %v53, 0
    %vm2283 = vcmp.gt.s32.totalorder %v54, 0
    %vm2284 = vcmp.gt.s32.totalorder %v55, 0
    %vm2285 = vcmp.gt.s32.totalorder %v56, 0
    %vm2286 = vcmp.gt.s32.totalorder %v57, 0
    %vm2287 = vcmp.gt.s32.totalorder %v58, 0
    %vm2288 = vcmp.gt.s32.totalorder %v59, 0
    %v2289 = vsel %vm2281, 1, 0
    %v2290 = vsel %vm2282, 1, 0
    %v2291 = vsel %vm2283, 1, 0
    %v2292 = vsel %vm2284, 1, 0
    %v2293 = vsel %vm2285, 1, 0
    %v2294 = vsel %vm2286, 1, 0
    %v2295 = vsel %vm2287, 1, 0
    %v2296 = vsel %vm2288, 1, 0
    %v2297 = vcvt.s32.f32 %v2289
    %v2298 = vcvt.s32.f32 %v2290
    %v2299 = vcvt.s32.f32 %v2291
    %v2300 = vcvt.s32.f32 %v2292
    %v2301 = vcvt.s32.f32 %v2293
    %v2302 = vcvt.s32.f32 %v2294
    %v2303 = vcvt.s32.f32 %v2295
    %v2304 = vcvt.s32.f32 %v2296
    %v2305 = vsub.f32 %v2024, %v2273
    %v2306 = vsub.f32 %v2025, %v2274
    %v2307 = vsub.f32 %v2026, %v2275
    %v2308 = vsub.f32 %v2027, %v2276
    %v2309 = vsub.f32 %v2028, %v2277
    %v2310 = vsub.f32 %v2029, %v2278
    %v2311 = vsub.f32 %v2030, %v2279
    %v2312 = vsub.f32 %v2031, %v2280
    %v2313 = vsub.f32 1.0, %v2305
    %v2314 = vsub.f32 1.0, %v2306
    %v2315 = vsub.f32 1.0, %v2307
    %v2316 = vsub.f32 1.0, %v2308
    %v2317 = vsub.f32 1.0, %v2309
    %v2318 = vsub.f32 1.0, %v2310
    %v2319 = vsub.f32 1.0, %v2311
    %v2320 = vsub.f32 1.0, %v2312
    %v2321 = vmax.f32 %v2313, 0.0
    %v2322 = vmax.f32 %v2314, 0.0
    %v2323 = vmax.f32 %v2315, 0.0
    %v2324 = vmax.f32 %v2316, 0.0
    %v2325 = vmax.f32 %v2317, 0.0
    %v2326 = vmax.f32 %v2318, 0.0
    %v2327 = vmax.f32 %v2319, 0.0
    %v2328 = vmax.f32 %v2320, 0.0
    %v2337 = vrot.slane %v2297, 5
    %v2338 = vrot.slane %v2298, 5
    %v2339 = vrot.slane %v2299, 5
    %v2340 = vrot.slane %v2300, 5
    %v2341 = vrot.slane %v2301, 5
    %v2342 = vrot.slane %v2302, 5
    %v2343 = vrot.slane %v2303, 5
    %v2344 = vrot.slane %v2304, 5
    %v2353 = vmul.f32 %v2321, %v2337
    %v2354 = vmul.f32 %v2322, %v2338
    %v2355 = vmul.f32 %v2323, %v2339
    %v2356 = vmul.f32 %v2324, %v2340
    %v2357 = vmul.f32 %v2325, %v2341
    %v2358 = vmul.f32 %v2326, %v2342
    %v2359 = vmul.f32 %v2327, %v2343
    %v2360 = vmul.f32 %v2328, %v2344
    %vm2361 = vcmask 0
    %v2362 = vsel %vm2361, %v2353, 0.0
    %v2363 = vsel %vm2361, %v2354, 0.0
    %v2364 = vadd.f32 %v2362, %v2363
    %v2365 = vsel %vm2361, %v2355, 0.0
    %v2366 = vadd.f32 %v2364, %v2365
    %v2367 = vsel %vm2361, %v2356, 0.0
    %v2368 = vadd.f32 %v2366, %v2367
    %v2369 = vsel %vm2361, %v2357, 0.0
    %v2370 = vadd.f32 %v2368, %v2369
    %v2371 = vsel %vm2361, %v2358, 0.0
    %v2372 = vadd.f32 %v2370, %v2371
    %v2373 = vsel %vm2361, %v2359, 0.0
    %v2374 = vadd.f32 %v2372, %v2373
    %v2375 = vsel %vm2361, %v2360, 0.0
    %v2376 = vadd.f32 %v2374, %v2375
    %2377 = vadd.xlane.f32.xlu0 %v2376
    %v2378 = vpop.xlane.xlu0 %2377
    %v2379 = vrot.slane %v2378, 4
    %v2380 = vadd.f32 %v2378, %v2379
    %v2381 = vrot.slane %v2380, 2
    %v2382 = vadd.f32 %v2380, %v2381
    %v2383 = vrot.slane %v2382, 1
    %v2384 = vadd.f32 %v2382, %v2383
    %s2385 = vtos %v2384
    %v2386 = vstv %s2385
    %2387 = vst [vmem:[%s5] sm:$0xff] %v2386
    // Predicated region
    $region30: #{seg_model_forward.1} parent=1 // pred_check
      _
    $region31: #{seg_model_forward.1} parent=1 // pred_check_branch
      %2389 = sbr.rel (0) target = $region33
    $region32: #{seg_model_forward.1} parent=1 // pred_region
      _
    $region33: #{seg_model_forward.1} parent=1 // pred_fallthru
      _
    // Predicated region
    $region34: #{seg_model_forward.1} parent=1 // pred_check
      _
    $region35: #{seg_model_forward.1} parent=1 // pred_check_branch
      %2391 = sbr.rel (0) target = $region37
    $region36: #{seg_model_forward.1} parent=1 // pred_region
      _
    $region37: #{seg_model_forward.1} parent=1 // pred_fallthru
      _
    %2392 = vsyncpa [#allocation3], 1
    %2393 = vsyncpa [#allocation5], 1

</llo_original>
